<compile_context>
chip_gen: v7x
topology: tpu7x:2x2x1
jax: 0.10.0
libtpu: 0.0.40
codegen_flags: <defaults>
</compile_context>

<pallas_src>
import functools
import math

import jax
import jax.numpy as jnp
from jax.experimental import pallas as pl
from jax.experimental.pallas import tpu as pltpu

_SUBLANE = 8
_LANE = 128
_DEFAULT_VMEM_CAPACITY = 64 * 1024 * 1024   # v7x per-TC (smallest of v5e/v6e/v7x)


def _round_up(x: int, m: int) -> int:
    return (x + m - 1) // m * m


def _vmem_capacity_bytes() -> int:
    try:
        return int(pltpu.get_tpu_info().vmem_capacity_bytes)
    except Exception:
        return _DEFAULT_VMEM_CAPACITY


def _pick_block(dim: int, pref: int, align: int, prefer_multi: bool = False) -> int:
    """Largest multiple of `align` that divides `dim` (itself a multiple of `align`)
    and is <= pref.  With prefer_multi, prefer a divisor leaving >= 2 tiles so a
    'parallel' grid axis can feed both v7x TensorCores."""
    hi = min(pref, dim)
    candidates = [t for t in range(align, hi + 1, align) if dim % t == 0]
    if not candidates:
        return align
    if prefer_multi:
        multi = [t for t in candidates if dim // t >= 2]
        if multi:
            return max(multi)
    return max(candidates)


def _is_f32(dtype) -> bool:
    return jnp.dtype(dtype) == jnp.dtype(jnp.float32)


# ---------------------------------------------------------------------------
# Fused whole-network kernel: weights resident in VMEM, batch tiles pipelined.
# ---------------------------------------------------------------------------
def _fused_mlp_kernel(*refs, n_layers, out_ws, compute_dtype, precision):
    """refs = (x, w0, b0, ..., w{L-1}, b{L-1}, out, act_buf0, act_buf1)."""
    x_ref = refs[0]
    o_ref = refs[1 + 2 * n_layers]
    act_bufs = refs[2 + 2 * n_layers:]          # two (tm, max_w) compute_dtype scratch

    cur_buf = -1        # -1 => current activation is the kernel input tile
    cur_w = 0
    for li in range(n_layers):                  # static loop, traced once
        w_ref = refs[1 + 2 * li]
        b_ref = refs[2 + 2 * li]
        a = x_ref[...] if cur_buf < 0 else act_bufs[cur_buf][:, :cur_w]
        acc = jnp.dot(a, w_ref[...], preferred_element_type=jnp.float32,
                      precision=precision)
        acc = acc + b_ref[...]                  # (1, out_w) f32 bias, broadcasts
        out_w = out_ws[li]
        if li == n_layers - 1:
            o_ref[...] = acc.astype(o_ref.dtype)     # only final layer hits HBM
        else:
            acc = jnp.maximum(acc, 0.0)
            nxt = 0 if cur_buf != 0 else 1           # ping-pong scratch buffers
            act_bufs[nxt][:, :out_w] = acc.astype(compute_dtype)
            cur_buf, cur_w = nxt, out_w


def pallas_mlp_fused(x, params, *, compute_dtype=jnp.bfloat16,
                     out_dtype=jnp.float32, tm=None):
    """x: (B, Din) f32, params: list of ((Din_i, Dout_i) w, (Dout_i,) b)."""
    B, Din = x.shape
    n_layers = len(params)
    out_dims = [w.shape[1] for (w, _) in params]

    Bp = _round_up(B, _SUBLANE)
    if tm is None:
        tm = _pick_block(Bp, 512, _SUBLANE, prefer_multi=(Bp >= 256))
    din_p = _round_up(Din, _LANE)
    out_dims_p = [_round_up(d, _LANE) for d in out_dims]
    in_dims_p = [din_p] + out_dims_p[:-1]
    max_w = max(out_dims_p[:-1]) if n_layers > 1 else _LANE

    # lane-dense, zero-padded inputs (padding contributes exactly 0 to every matmul)
    x_p = jnp.pad(x, ((0, Bp - B), (0, din_p - Din))).astype(compute_dtype)
    flat_inputs = [x_p]
    in_specs = [pl.BlockSpec((tm, din_p), lambda i: (i, 0))]
    for li, (w, b) in enumerate(params):
        w_p = jnp.pad(w, ((0, in_dims_p[li] - w.shape[0]),
                          (0, out_dims_p[li] - w.shape[1]))).astype(compute_dtype)
        b_p = jnp.pad(b, (0, out_dims_p[li] - b.shape[0])
                      ).reshape(1, -1).astype(jnp.float32)
        flat_inputs += [w_p, b_p]
        in_specs += [pl.BlockSpec(w_p.shape, lambda i: (0, 0)),   # resident weights
                     pl.BlockSpec(b_p.shape, lambda i: (0, 0))]

    precision = jax.lax.Precision.HIGHEST if _is_f32(compute_dtype) else None
    kernel = functools.partial(
        _fused_mlp_kernel,
        n_layers=n_layers,
        out_ws=tuple(out_dims_p),
        compute_dtype=compute_dtype,
        precision=precision,
    )
    vmem_cap = _vmem_capacity_bytes()
    out_p = pl.pallas_call(
        kernel,
        out_shape=jax.ShapeDtypeStruct((Bp, out_dims_p[-1]), out_dtype),
        grid=(Bp // tm,),
        in_specs=in_specs,
        out_specs=pl.BlockSpec((tm, out_dims_p[-1]), lambda i: (i, 0)),
        scratch_shapes=[pltpu.VMEM((tm, max_w), compute_dtype),
                        pltpu.VMEM((tm, max_w), compute_dtype)],
        compiler_params=pltpu.CompilerParams(
            dimension_semantics=("parallel",),
            vmem_limit_bytes=int(0.9 * vmem_cap)),
    )(*flat_inputs)
    return out_p[:B, :out_dims[-1]]


def _fused_vmem_bytes(params, x, compute_dtype, tm) -> int:
    """VMEM footprint of the fused path.  Resident weights/biases counted once;
    only the batch-blocked x/out tiles get the double-buffer factor."""
    itemsize = jnp.dtype(compute_dtype).itemsize
    dims_p = [_round_up(x.shape[1], _LANE)] + [_round_up(w.shape[1], _LANE)
                                               for (w, _) in params]
    w_bytes = sum(dims_p[i] * dims_p[i + 1] for i in range(len(params))) * itemsize
    b_bytes = sum(dims_p[1:]) * 4
    io_bytes = 2 * tm * (dims_p[0] * itemsize + dims_p[-1] * 4)   # double-buffered tiles
    hid = max(dims_p[1:-1]) if len(dims_p) > 2 else _LANE
    act_bytes = 2 * tm * hid * itemsize                           # ping-pong scratch
    return w_bytes + b_bytes + io_bytes + act_bytes


# ---------------------------------------------------------------------------
# Tiled single-layer fallback for large B / Din / Dout.
# ---------------------------------------------------------------------------
def _tiled_linear_kernel(x_ref, w_ref, b_ref, o_ref, acc_ref, *, apply_relu, precision):
    @pl.when(pl.program_id(2) == 0)
    def _():
        acc_ref[...] = jnp.zeros_like(acc_ref)

    acc_ref[...] += jnp.dot(x_ref[...], w_ref[...],
                            preferred_element_type=jnp.float32,
                            precision=precision)

    @pl.when(pl.program_id(2) == pl.num_programs(2) - 1)
    def _():
        out = acc_ref[...] + b_ref[...]
        if apply_relu:
            out = jnp.maximum(out, 0.0)
        o_ref[...] = out.astype(o_ref.dtype)


def _pallas_linear_tiled_padded(x_p, w, b, *, apply_relu, out_dtype,
                                tm, tn_pref=512, tk_pref=1024):
    """x_p: (Mp, Kp) already padded (Kp = round_up(Din,128), Mp % tm == 0) and already
    in the compute dtype.  Returns the PADDED output (Mp, round_up(Dout,128)) so layers
    can be chained without per-layer slice/re-pad/re-cast glue."""
    Mp, Kp = x_p.shape
    Din, Dout = w.shape
    Np = _round_up(Dout, _LANE)
    compute_dtype = x_p.dtype

    m_tiles = Mp // tm
    tk = _pick_block(Kp, tk_pref, _LANE)
    # guarantee >= 2 tiles on some parallel axis (v7x megacore) when M alone can't
    tn = _pick_block(Np, tn_pref, _LANE, prefer_multi=(m_tiles < 2))

    w_p = jnp.pad(w, ((0, Kp - Din), (0, Np - Dout))).astype(compute_dtype)
    b_p = jnp.pad(b, (0, Np - Dout)).reshape(1, Np).astype(jnp.float32)

    precision = jax.lax.Precision.HIGHEST if _is_f32(compute_dtype) else None
    kernel = functools.partial(_tiled_linear_kernel, apply_relu=apply_relu,
                               precision=precision)
    vmem_cap = _vmem_capacity_bytes()
    out_p = pl.pallas_call(
        kernel,
        out_shape=jax.ShapeDtypeStruct((Mp, Np), out_dtype),
        grid=(Mp // tm, Np // tn, Kp // tk),
        in_specs=[
            pl.BlockSpec((tm, tk), lambda i, j, k: (i, k)),
            pl.BlockSpec((tk, tn), lambda i, j, k: (k, j)),
            pl.BlockSpec((1, tn), lambda i, j, k: (0, j)),
        ],
        out_specs=pl.BlockSpec((tm, tn), lambda i, j, k: (i, j)),
        scratch_shapes=[pltpu.VMEM((tm, tn), jnp.float32)],
        compiler_params=pltpu.CompilerParams(
            dimension_semantics=("parallel", "parallel", "arbitrary"),
            vmem_limit_bytes=int(0.9 * vmem_cap)),
    )(x_p, w_p, b_p)
    return out_p


def pallas_linear_tiled(x, w, b, *, apply_relu, compute_dtype=jnp.bfloat16,
                        out_dtype=jnp.float32, tm_pref=512, tn_pref=512, tk_pref=1024):
    """Standalone tiled (B,Din)x(Din,Dout) linear with f32 accumulator."""
    B, Din = x.shape
    Dout = w.shape[1]
    Mp = _round_up(B, _SUBLANE)                       # minimal M padding
    Kp = _round_up(Din, _LANE)
    tm = _pick_block(Mp, tm_pref, _SUBLANE, prefer_multi=(Mp >= 256))
    x_p = jnp.pad(x, ((0, Mp - B), (0, Kp - Din))).astype(compute_dtype)
    out_p = _pallas_linear_tiled_padded(x_p, w, b, apply_relu=apply_relu,
                                        out_dtype=out_dtype, tm=tm,
                                        tn_pref=tn_pref, tk_pref=tk_pref)
    return out_p[:B, :Dout]


def _mlp_forward_tiled(params, x, *, compute_dtype=jnp.bfloat16,
                       out_dtype=jnp.float32, tm_pref=512, tn_pref=512, tk_pref=1024):
    """Per-layer tiled fallback.  Intermediates stay padded and in compute_dtype
    between layers; only the final layer writes out_dtype and gets sliced."""
    B, Din = x.shape
    Mp = _round_up(B, _SUBLANE)
    Kp = _round_up(Din, _LANE)
    tm = _pick_block(Mp, tm_pref, _SUBLANE, prefer_multi=(Mp >= 256))
    cur = jnp.pad(x, ((0, Mp - B), (0, Kp - Din))).astype(compute_dtype)
    n = len(params)
    for it, (w, b) in enumerate(params):
        last = it == n - 1
        cur = _pallas_linear_tiled_padded(
            cur, w, b, apply_relu=not last,
            out_dtype=out_dtype if last else compute_dtype,
            tm=tm, tn_pref=tn_pref, tk_pref=tk_pref)
    return cur[:B, :params[-1][0].shape[1]]


# ---------------------------------------------------------------------------
# Parameter init + forward (same semantics as the PyTorch MLP module).
# ---------------------------------------------------------------------------
def init_mlp_params(key, n_inputs, n_hidden, n_classes):
    """PyTorch nn.Linear default init: U(-1/sqrt(fan_in), 1/sqrt(fan_in))."""
    dims = [n_inputs] + list(n_hidden) + [n_classes]
    params = []
    for i in range(len(dims) - 1):
        fan_in, fan_out = dims[i], dims[i + 1]
        key, kw, kb = jax.random.split(key, 3)
        bound = 1.0 / math.sqrt(fan_in)
        w = jax.random.uniform(kw, (fan_in, fan_out), jnp.float32, -bound, bound)
        b = jax.random.uniform(kb, (fan_out,), jnp.float32, -bound, bound)
        params.append((w, b))
    return params


def mlp_forward(params, x, *, compute_dtype=jnp.bfloat16, out_dtype=jnp.float32):
    """Prefer the single fused kernel whenever the weight stack fits comfortably in
    VMEM (per-generation budget); otherwise chain tiled, pipelined matmul kernels
    with bf16 padded intermediates."""
    B = x.shape[0]
    Bp = _round_up(B, _SUBLANE)
    tm = _pick_block(Bp, 512, _SUBLANE, prefer_multi=(Bp >= 256))
    budget = int(0.4 * _vmem_capacity_bytes())       # headroom for double-buffering
    if _fused_vmem_bytes(params, x, compute_dtype, tm) < budget:
        return pallas_mlp_fused(x, params, compute_dtype=compute_dtype,
                                out_dtype=out_dtype, tm=tm)
    return _mlp_forward_tiled(params, x, compute_dtype=compute_dtype,
                              out_dtype=out_dtype)


if __name__ == "__main__":
    key = jax.random.PRNGKey(0)
    key, kx = jax.random.split(key)

    # small shapes consistent with the module's forward
    batch = 8
    n_inputs = 64
    n_hidden = [32, 32]
    n_classes = 16

    x = jax.random.normal(kx, (batch, n_inputs), dtype=jnp.float32)
    params = init_mlp_params(key, n_inputs, n_hidden, n_classes)

    def ref_forward(ps, xin):
        out = xin
        for it, (w, b) in enumerate(ps):
            out = jnp.dot(out, w, precision=jax.lax.Precision.HIGHEST) + b
            if it != len(ps) - 1:
                out = jnp.maximum(out, 0.0)
        return out

    ref = ref_forward(params, x)

    # 1) fused kernel, f32 matmuls at HIGHEST precision: tight match
    out_f32 = jax.block_until_ready(mlp_forward(params, x, compute_dtype=jnp.float32))
    assert out_f32.shape == (batch, n_classes)
    assert jnp.allclose(out_f32, ref, atol=1e-5, rtol=1e-5)

    # 2) fused kernel, bf16 matmuls + f32 accumulate (fast production path)
    out_bf16 = jax.block_until_ready(mlp_forward(params, x, compute_dtype=jnp.bfloat16))
    assert out_bf16.shape == (batch, n_classes)
    assert jnp.allclose(out_bf16, ref, atol=5e-2, rtol=5e-2)

    # 3) multi-layer tiled fallback on a larger, padding-exercising MLP (B=300 -> Mp=304)
    key2, kx2 = jax.random.split(key)
    big_x = jax.random.normal(kx2, (300, 384), dtype=jnp.float32)
    big_params = init_mlp_params(key2, 384, [256], 200)
    ref_big = ref_forward(big_params, big_x)

    out_big_f32 = jax.block_until_ready(
        _mlp_forward_tiled(big_params, big_x, compute_dtype=jnp.float32))
    assert out_big_f32.shape == (300, 200)
    assert jnp.allclose(out_big_f32, ref_big, atol=1e-4, rtol=1e-4)

    out_big_bf16 = jax.block_until_ready(
        _mlp_forward_tiled(big_params, big_x, compute_dtype=jnp.bfloat16))
    assert jnp.allclose(out_big_bf16, ref_big, atol=7e-2, rtol=7e-2)

    # 4) standalone tiled linear (bias + relu), padding-exercising single layer
    k3, kw3, kb3 = jax.random.split(key2, 3)
    xb = jax.random.normal(k3, (300, 384), dtype=jnp.float32)
    wb = jax.random.normal(kw3, (384, 200), dtype=jnp.float32) * 0.05
    bb = jax.random.normal(kb3, (200,), dtype=jnp.float32)
    out_t = jax.block_until_ready(
        pallas_linear_tiled(xb, wb, bb, apply_relu=True, compute_dtype=jnp.float32))
    ref_t = jnp.maximum(
        jnp.dot(xb, wb, precision=jax.lax.Precision.HIGHEST) + bb, 0.0)
    assert out_t.shape == (300, 200)
    assert jnp.allclose(out_t, ref_t, atol=1e-4, rtol=1e-4)

    print("KERNEL_OK")
</pallas_src>

<mosaic_0001>
module attributes {stable_mosaic.version = 11 : i64} {
  func.func @_fused_mlp_kernel(%arg0: i32, %arg1: memref<8x128xf32, #tpu.memory_space<vmem>>, %arg2: memref<128x128xf32, #tpu.memory_space<vmem>>, %arg3: memref<1x128xf32, #tpu.memory_space<vmem>>, %arg4: memref<128x128xf32, #tpu.memory_space<vmem>>, %arg5: memref<1x128xf32, #tpu.memory_space<vmem>>, %arg6: memref<128x128xf32, #tpu.memory_space<vmem>>, %arg7: memref<1x128xf32, #tpu.memory_space<vmem>>, %arg8: memref<8x128xf32, #tpu.memory_space<vmem>>, %arg9: memref<8x128xf32, #tpu.memory_space<vmem>>, %arg10: memref<8x128xf32, #tpu.memory_space<vmem>>) attributes {dimension_semantics = [#tpu.dimension_semantics<parallel>], iteration_bounds = array<i64: 1>, scalar_prefetch = 0 : i64, scratch_operands = 2 : i64, tpu.core_type = #tpu.core_type<tc>, window_params = [{transform_indices = @transform_0, window_bounds = array<i64: 8, 128>}, {pipeline_mode = #tpu.pipeline_mode<synchronous>, transform_indices = @transform_1, window_bounds = array<i64: 128, 128>}, {pipeline_mode = #tpu.pipeline_mode<synchronous>, transform_indices = @transform_2, window_bounds = array<i64: 1, 128>}, {pipeline_mode = #tpu.pipeline_mode<synchronous>, transform_indices = @transform_3, window_bounds = array<i64: 128, 128>}, {pipeline_mode = #tpu.pipeline_mode<synchronous>, transform_indices = @transform_4, window_bounds = array<i64: 1, 128>}, {pipeline_mode = #tpu.pipeline_mode<synchronous>, transform_indices = @transform_5, window_bounds = array<i64: 128, 128>}, {pipeline_mode = #tpu.pipeline_mode<synchronous>, transform_indices = @transform_6, window_bounds = array<i64: 1, 128>}, {transform_indices = @transform_7, window_bounds = array<i64: 8, 128>}]} {
    %c0 = arith.constant 0 : index
    %c0_0 = arith.constant 0 : index
    %0 = vector.load %arg1[%c0, %c0_0] : memref<8x128xf32, #tpu.memory_space<vmem>>, vector<8x128xf32>
    %c0_1 = arith.constant 0 : index
    %c0_2 = arith.constant 0 : index
    %1 = vector.load %arg2[%c0_1, %c0_2] : memref<128x128xf32, #tpu.memory_space<vmem>>, vector<128x128xf32>
    %cst = arith.constant dense<0.000000e+00> : vector<8x128xf32>
    %2 = tpu.matmul %0, %1, %cst {dimension_numbers = #tpu.dot_dimension_numbers<[1], [0], [0], [1], [0, 0, 1, 1], [], []>, precision = #tpu.contract_precision<fp32>} : vector<8x128xf32>, vector<128x128xf32>, vector<8x128xf32> -> vector<8x128xf32>
    %c0_3 = arith.constant 0 : index
    %c0_4 = arith.constant 0 : index
    %3 = vector.load %arg3[%c0_3, %c0_4] : memref<1x128xf32, #tpu.memory_space<vmem>>, vector<1x128xf32>
    %4 = vector.broadcast %3 : vector<1x128xf32> to vector<8x128xf32>
    %5 = arith.addf %2, %4 : vector<8x128xf32>
    %cst_5 = arith.constant 0.000000e+00 : f32
    %6 = vector.broadcast %cst_5 : f32 to vector<8x128xf32>
    %7 = arith.maximumf %5, %6 : vector<8x128xf32>
    %c0_6 = arith.constant 0 : index
    %c0_7 = arith.constant 0 : index
    %8 = vector.load %arg9[%c0_6, %c0_7] : memref<8x128xf32, #tpu.memory_space<vmem>>, vector<8x128xf32>
    tpu.vector_store %arg9[%c0_6, %c0_7], %7 {strides = array<i32>} : memref<8x128xf32, #tpu.memory_space<vmem>>, vector<8x128xf32>,
    %c0_8 = arith.constant 0 : index
    %c0_9 = arith.constant 0 : index
    %9 = vector.load %arg9[%c0_8, %c0_9] : memref<8x128xf32, #tpu.memory_space<vmem>>, vector<8x128xf32>
    %c0_10 = arith.constant 0 : index
    %c0_11 = arith.constant 0 : index
    %10 = vector.load %arg4[%c0_10, %c0_11] : memref<128x128xf32, #tpu.memory_space<vmem>>, vector<128x128xf32>
    %cst_12 = arith.constant dense<0.000000e+00> : vector<8x128xf32>
    %11 = tpu.matmul %9, %10, %cst_12 {dimension_numbers = #tpu.dot_dimension_numbers<[1], [0], [0], [1], [0, 0, 1, 1], [], []>, precision = #tpu.contract_precision<fp32>} : vector<8x128xf32>, vector<128x128xf32>, vector<8x128xf32> -> vector<8x128xf32>
    %c0_13 = arith.constant 0 : index
    %c0_14 = arith.constant 0 : index
    %12 = vector.load %arg5[%c0_13, %c0_14] : memref<1x128xf32, #tpu.memory_space<vmem>>, vector<1x128xf32>
    %13 = vector.broadcast %12 : vector<1x128xf32> to vector<8x128xf32>
    %14 = arith.addf %11, %13 : vector<8x128xf32>
    %cst_15 = arith.constant 0.000000e+00 : f32
    %15 = vector.broadcast %cst_15 : f32 to vector<8x128xf32>
    %16 = arith.maximumf %14, %15 : vector<8x128xf32>
    %c0_16 = arith.constant 0 : index
    %c0_17 = arith.constant 0 : index
    %17 = vector.load %arg10[%c0_16, %c0_17] : memref<8x128xf32, #tpu.memory_space<vmem>>, vector<8x128xf32>
    tpu.vector_store %arg10[%c0_16, %c0_17], %16 {strides = array<i32>} : memref<8x128xf32, #tpu.memory_space<vmem>>, vector<8x128xf32>,
    %c0_18 = arith.constant 0 : index
    %c0_19 = arith.constant 0 : index
    %18 = vector.load %arg10[%c0_18, %c0_19] : memref<8x128xf32, #tpu.memory_space<vmem>>, vector<8x128xf32>
    %c0_20 = arith.constant 0 : index
    %c0_21 = arith.constant 0 : index
    %19 = vector.load %arg6[%c0_20, %c0_21] : memref<128x128xf32, #tpu.memory_space<vmem>>, vector<128x128xf32>
    %cst_22 = arith.constant dense<0.000000e+00> : vector<8x128xf32>
    %20 = tpu.matmul %18, %19, %cst_22 {dimension_numbers = #tpu.dot_dimension_numbers<[1], [0], [0], [1], [0, 0, 1, 1], [], []>, precision = #tpu.contract_precision<fp32>} : vector<8x128xf32>, vector<128x128xf32>, vector<8x128xf32> -> vector<8x128xf32>
    %c0_23 = arith.constant 0 : index
    %c0_24 = arith.constant 0 : index
    %21 = vector.load %arg7[%c0_23, %c0_24] : memref<1x128xf32, #tpu.memory_space<vmem>>, vector<1x128xf32>
    %22 = vector.broadcast %21 : vector<1x128xf32> to vector<8x128xf32>
    %23 = arith.addf %20, %22 : vector<8x128xf32>
    %c0_25 = arith.constant 0 : index
    %c0_26 = arith.constant 0 : index
    %24 = vector.load %arg8[%c0_25, %c0_26] : memref<8x128xf32, #tpu.memory_space<vmem>>, vector<8x128xf32>
    tpu.vector_store %arg8[%c0_25, %c0_26], %23 {strides = array<i32>} : memref<8x128xf32, #tpu.memory_space<vmem>>, vector<8x128xf32>,
    return
  }
  func.func @transform_0(%arg0: i32) -> (i32, i32) {
    %c0_i32 = arith.constant 0 : i32
    %c0_i32_0 = arith.constant 0 : i32
    return %arg0, %c0_i32 : i32, i32
  }
  func.func @transform_1(%arg0: i32) -> (i32, i32) {
    %c0_i32 = arith.constant 0 : i32
    %c0_i32_0 = arith.constant 0 : i32
    %c0_i32_1 = arith.constant 0 : i32
    return %c0_i32, %c0_i32_0 : i32, i32
  }
  func.func @transform_2(%arg0: i32) -> (i32, i32) {
    %c0_i32 = arith.constant 0 : i32
    %c0_i32_0 = arith.constant 0 : i32
    %c0_i32_1 = arith.constant 0 : i32
    return %c0_i32, %c0_i32_0 : i32, i32
  }
  func.func @transform_3(%arg0: i32) -> (i32, i32) {
    %c0_i32 = arith.constant 0 : i32
    %c0_i32_0 = arith.constant 0 : i32
    %c0_i32_1 = arith.constant 0 : i32
    return %c0_i32, %c0_i32_0 : i32, i32
  }
  func.func @transform_4(%arg0: i32) -> (i32, i32) {
    %c0_i32 = arith.constant 0 : i32
    %c0_i32_0 = arith.constant 0 : i32
    %c0_i32_1 = arith.constant 0 : i32
    return %c0_i32, %c0_i32_0 : i32, i32
  }
  func.func @transform_5(%arg0: i32) -> (i32, i32) {
    %c0_i32 = arith.constant 0 : i32
    %c0_i32_0 = arith.constant 0 : i32
    %c0_i32_1 = arith.constant 0 : i32
    return %c0_i32, %c0_i32_0 : i32, i32
  }
  func.func @transform_6(%arg0: i32) -> (i32, i32) {
    %c0_i32 = arith.constant 0 : i32
    %c0_i32_0 = arith.constant 0 : i32
    %c0_i32_1 = arith.constant 0 : i32
    return %c0_i32, %c0_i32_0 : i32, i32
  }
  func.func @transform_7(%arg0: i32) -> (i32, i32) {
    %c0_i32 = arith.constant 0 : i32
    %c0_i32_0 = arith.constant 0 : i32
    return %arg0, %c0_i32 : i32, i32
  }
}

</mosaic_0001>

<llo_original>
// kernel: tpu_custom_call.1
$region0: #{tpu_custom_call.1}
  #allocation0 [shape = 'u32[]', space=smem, size = 0x4, offset = 0x4, fixed_abs, tag = 'smem constant byte address 0x4 - core index']
  #allocation1 [shape = 'u32[144,128]{1,0:T(1,128)}', space=vmem, size = 0x12000, scoped, tag = 'internal scratch']
  #allocation2 [shape = 'f32[8,128]{1,0:T(8,128)}', space=vmem, size = 0x1000, scoped, tag = 'scratch operand']
  #allocation3 [shape = 'f32[8,128]{1,0:T(8,128)}', space=vmem, size = 0x1000, scoped, tag = 'scratch operand']
  %s0 = inlined_call_operand.hbm [shape: f32[8,128], index: 0, kind: input, shape index: {}]
  %s1 = inlined_call_operand.hbm [shape: f32[128,128], index: 1, kind: input, shape index: {}]
  %s2 = inlined_call_operand.vmem [shape: f32[1,128], index: 2, kind: input, shape index: {}]
  %s3 = inlined_call_operand.hbm [shape: f32[128,128], index: 3, kind: input, shape index: {}]
  %s4 = inlined_call_operand.vmem [shape: f32[1,128], index: 4, kind: input, shape index: {}]
  %s5 = inlined_call_operand.hbm [shape: f32[128,128], index: 5, kind: input, shape index: {}]
  %s6 = inlined_call_operand.vmem [shape: f32[1,128], index: 6, kind: input, shape index: {}]
  %s7 = inlined_call_operand.hbm [shape: f32[8,128], index: 7, kind: output, shape index: {}]
  %s8 = sld [smem:[#allocation0]]
  $region54: #{tpu_custom_call.1} parent=0
    _
  %s10 = ssub.s32 1, %s8
  %s11 = scalar_select 0, %s10, %s8
  $region1: #{tpu_custom_call.1} parent=0
    #allocation4 [shape = 'u8[4096]{0}', space=vmem, size = 0x1000, scoped, tag = 'input window, operand 0, single buffered']
    #allocation5 [shape = 's32[1]{0}', space=sflag, size = 0x4, scoped, tag = 'scoped memory for tpu_custom_call.1']
    #allocation6 [shape = 's32[1]{0}', space=sflag, size = 0x4, scoped, tag = 'scoped memory for tpu_custom_call.1']
    #allocation7 [shape = 'u8[65536]{0}', space=vmem, size = 0x10000, scoped, tag = 'input window, operand 1, single buffered']
    #allocation8 [shape = 's32[1]{0}', space=sflag, size = 0x4, scoped, tag = 'scoped memory for tpu_custom_call.1']
    #allocation9 [shape = 'u8[65536]{0}', space=vmem, size = 0x10000, scoped, tag = 'input window, operand 3, single buffered']
    #allocation10 [shape = 'u8[65536]{0}', space=vmem, size = 0x10000, scoped, tag = 'input window, operand 5, single buffered']
    #allocation11 [shape = 's32[1]{0}', space=sflag, size = 0x4, scoped, tag = 'scoped memory for tpu_custom_call.1']
    #allocation12 [shape = 'u8[4096]{0}', space=vmem, size = 0x1000, scoped, tag = 'output window, operand 0, single buffered']
    %12 = vsyncpa [#allocation5], 0
    %13 = vsyncpa [#allocation8], 0
    %14 = vsyncpa [#allocation11], 0
    %15 = vsyncpa [#allocation6], 0
    // Predicated region
    $region2: #{tpu_custom_call.1} parent=1 // pred_check
      _
    $region3: #{tpu_custom_call.1} parent=1 // pred_check_branch
      %17 = sbr.rel (0) target = $region5
    $region4: #{tpu_custom_call.1} parent=1 // pred_region
      %s19 = ssub.s32 128, 128
      %20 = vsyncadd [#allocation5], %s19
      %s22 = sshll.u32 [#allocation4], 4
      %s23 = int_to_ptr.vmem [resolvable:$true] %s22
      %25 = dma.hbm_to_vmem [thread:$0]  %s0, 128, %s23, [#allocation5]
    $region5: #{tpu_custom_call.1} parent=1 // pred_fallthru
      _
    // Predicated region
    $region6: #{tpu_custom_call.1} parent=1 // pred_check
      _
    $region7: #{tpu_custom_call.1} parent=1 // pred_check_branch
      %27 = sbr.rel (0) target = $region9
    $region8: #{tpu_custom_call.1} parent=1 // pred_region
      %s29 = ssub.s32 2048, 2048
      %30 = vsyncadd [#allocation8], %s29
      %s31 = sshll.u32 [#allocation7], 4
      %s32 = int_to_ptr.vmem [resolvable:$true] %s31
      %37 = dma.hbm_to_vmem [thread:$0]  %s1, 2048, %s32, [#allocation8], 128, 128, 8
    $region9: #{tpu_custom_call.1} parent=1 // pred_fallthru
      _
    // Predicated region
    $region10: #{tpu_custom_call.1} parent=1 // pred_check
      _
    $region11: #{tpu_custom_call.1} parent=1 // pred_check_branch
      %39 = sbr.rel (0) target = $region13
    $region12: #{tpu_custom_call.1} parent=1 // pred_region
      _
    $region13: #{tpu_custom_call.1} parent=1 // pred_fallthru
      _
    // Predicated region
    $region14: #{tpu_custom_call.1} parent=1 // pred_check
      _
    $region15: #{tpu_custom_call.1} parent=1 // pred_check_branch
      %41 = sbr.rel (0) target = $region17
    $region16: #{tpu_custom_call.1} parent=1 // pred_region
      %s43 = ssub.s32 2048, 2048
      %44 = vsyncadd [#allocation8], %s43
      %s45 = sshll.u32 [#allocation9], 4
      %s46 = int_to_ptr.vmem [resolvable:$true] %s45
      %51 = dma.hbm_to_vmem [thread:$0]  %s3, 2048, %s46, [#allocation8], 128, 128, 8
    $region17: #{tpu_custom_call.1} parent=1 // pred_fallthru
      _
    // Predicated region
    $region18: #{tpu_custom_call.1} parent=1 // pred_check
      _
    $region19: #{tpu_custom_call.1} parent=1 // pred_check_branch
      %53 = sbr.rel (0) target = $region21
    $region20: #{tpu_custom_call.1} parent=1 // pred_region
      _
    $region21: #{tpu_custom_call.1} parent=1 // pred_fallthru
      _
    // Predicated region
    $region22: #{tpu_custom_call.1} parent=1 // pred_check
      _
    $region23: #{tpu_custom_call.1} parent=1 // pred_check_branch
      %55 = sbr.rel (0) target = $region25
    $region24: #{tpu_custom_call.1} parent=1 // pred_region
      %s57 = ssub.s32 2048, 2048
      %58 = vsyncadd [#allocation11], %s57
      %s59 = sshll.u32 [#allocation10], 4
      %s60 = int_to_ptr.vmem [resolvable:$true] %s59
      %65 = dma.hbm_to_vmem [thread:$0]  %s5, 2048, %s60, [#allocation11], 128, 128, 8
    $region25: #{tpu_custom_call.1} parent=1 // pred_fallthru
      _
    // Predicated region
    $region26: #{tpu_custom_call.1} parent=1 // pred_check
      _
    $region27: #{tpu_custom_call.1} parent=1 // pred_check_branch
      %67 = sbr.rel (0) target = $region29
    $region28: #{tpu_custom_call.1} parent=1 // pred_region
      _
    $region29: #{tpu_custom_call.1} parent=1 // pred_fallthru
      _
    // Predicated region
    $region30: #{tpu_custom_call.1} parent=1 // pred_check
      _
    $region31: #{tpu_custom_call.1} parent=1 // pred_check_branch
      %69 = sbr.rel (0) target = $region33
    $region32: #{tpu_custom_call.1} parent=1 // pred_region
      %70 = dma.done [#allocation5], 128
    $region33: #{tpu_custom_call.1} parent=1 // pred_fallthru
      _
    // Predicated region
    $region34: #{tpu_custom_call.1} parent=1 // pred_check
      _
    $region35: #{tpu_custom_call.1} parent=1 // pred_check_branch
      %72 = sbr.rel (0) target = $region37
    $region36: #{tpu_custom_call.1} parent=1 // pred_region
      %73 = dma.done [#allocation8], 2048
    $region37: #{tpu_custom_call.1} parent=1 // pred_fallthru
      _
    // Predicated region
    $region38: #{tpu_custom_call.1} parent=1 // pred_check
      _
    $region39: #{tpu_custom_call.1} parent=1 // pred_check_branch
      %75 = sbr.rel (0) target = $region41
    $region40: #{tpu_custom_call.1} parent=1 // pred_region
      %76 = dma.done [#allocation8], 2048
    $region41: #{tpu_custom_call.1} parent=1 // pred_fallthru
      _
    // Predicated region
    $region42: #{tpu_custom_call.1} parent=1 // pred_check
      _
    $region43: #{tpu_custom_call.1} parent=1 // pred_check_branch
      %78 = sbr.rel (0) target = $region45
    $region44: #{tpu_custom_call.1} parent=1 // pred_region
      %79 = dma.done [#allocation11], 2048
    $region45: #{tpu_custom_call.1} parent=1 // pred_fallthru
      _
    %v80 = vld [vmem:[#allocation4] sm:$0xff]
    %v81 = vld [vmem:[#allocation7] sm:$0xff]
    %v82 = vld [vmem:[#allocation7 + $0x8] sm:$0xff]
    %v83 = vld [vmem:[#allocation7 + $0x10] sm:$0xff]
    %v84 = vld [vmem:[#allocation7 + $0x18] sm:$0xff]
    %v85 = vld [vmem:[#allocation7 + $0x20] sm:$0xff]
    %v86 = vld [vmem:[#allocation7 + $0x28] sm:$0xff]
    %v87 = vld [vmem:[#allocation7 + $0x30] sm:$0xff]
    %v88 = vld [vmem:[#allocation7 + $0x38] sm:$0xff]
    %v89 = vld [vmem:[#allocation7 + $0x40] sm:$0xff]
    %v90 = vld [vmem:[#allocation7 + $0x48] sm:$0xff]
    %v91 = vld [vmem:[#allocation7 + $0x50] sm:$0xff]
    %v92 = vld [vmem:[#allocation7 + $0x58] sm:$0xff]
    %v93 = vld [vmem:[#allocation7 + $0x60] sm:$0xff]
    %v94 = vld [vmem:[#allocation7 + $0x68] sm:$0xff]
    %v95 = vld [vmem:[#allocation7 + $0x70] sm:$0xff]
    %v96 = vld [vmem:[#allocation7 + $0x78] sm:$0xff]
    %v97 = vld [vmem:[%s2] sm:$0x1]
    %v99 = vlaneseq
    %v100 = vshrl.u32 %v99, 7
    %v101 = vsub.s32 0, %v100
    %v102 = vrot.slane %v97, %v101
    %104 = vmatprep.subr.mxu0 0.0
    %v105 = vand.u32 %v81, 4294901760
    %106 = vmatpush1.msra.mxu0 %v105
    %107 = vmatprep.subr.mxu0 0.0
    %v108 = vand.u32 %v82, 4294901760
    %109 = vmatpush1.msra.mxu0 %v108
    %110 = vmatprep.subr.mxu0 0.0
    %v111 = vand.u32 %v83, 4294901760
    %112 = vmatpush1.msra.mxu0 %v111
    %113 = vmatprep.subr.mxu0 0.0
    %v114 = vand.u32 %v84, 4294901760
    %115 = vmatpush1.msra.mxu0 %v114
    %116 = vmatprep.subr.mxu0 0.0
    %v117 = vand.u32 %v85, 4294901760
    %118 = vmatpush1.msra.mxu0 %v117
    %119 = vmatprep.subr.mxu0 0.0
    %v120 = vand.u32 %v86, 4294901760
    %121 = vmatpush1.msra.mxu0 %v120
    %122 = vmatprep.subr.mxu0 0.0
    %v123 = vand.u32 %v87, 4294901760
    %124 = vmatpush1.msra.mxu0 %v123
    %125 = vmatprep.subr.mxu0 0.0
    %v126 = vand.u32 %v88, 4294901760
    %127 = vmatpush1.msra.mxu0 %v126
    %128 = vmatprep.subr.mxu0 0.0
    %v129 = vand.u32 %v89, 4294901760
    %130 = vmatpush1.msra.mxu0 %v129
    %131 = vmatprep.subr.mxu0 0.0
    %v132 = vand.u32 %v90, 4294901760
    %133 = vmatpush1.msra.mxu0 %v132
    %134 = vmatprep.subr.mxu0 0.0
    %v135 = vand.u32 %v91, 4294901760
    %136 = vmatpush1.msra.mxu0 %v135
    %137 = vmatprep.subr.mxu0 0.0
    %v138 = vand.u32 %v92, 4294901760
    %139 = vmatpush1.msra.mxu0 %v138
    %140 = vmatprep.subr.mxu0 0.0
    %v141 = vand.u32 %v93, 4294901760
    %142 = vmatpush1.msra.mxu0 %v141
    %143 = vmatprep.subr.mxu0 0.0
    %v144 = vand.u32 %v94, 4294901760
    %145 = vmatpush1.msra.mxu0 %v144
    %146 = vmatprep.subr.mxu0 0.0
    %v147 = vand.u32 %v95, 4294901760
    %148 = vmatpush1.msra.mxu0 %v147
    %149 = vmatprep.subr.mxu0 0.0
    %v150 = vand.u32 %v96, 4294901760
    %151 = vmatpush1.msra.mxu0 %v150
    %152 = vmatprep.subr.mxu0 0.0
    %153 = vmatpush1.msra.mxu0 0.0
    %154 = vmatprep.subr.mxu0 0.0
    %155 = vmatpush1.msra.mxu0 0.0
    %156 = vmatprep.subr.mxu0 0.0
    %157 = vmatpush1.msra.mxu0 0.0
    %158 = vmatprep.subr.mxu0 0.0
    %159 = vmatpush1.msra.mxu0 0.0
    %160 = vmatprep.subr.mxu0 0.0
    %161 = vmatpush1.msra.mxu0 0.0
    %162 = vmatprep.subr.mxu0 0.0
    %163 = vmatpush1.msra.mxu0 0.0
    %164 = vmatprep.subr.mxu0 0.0
    %165 = vmatpush1.msra.mxu0 0.0
    %166 = vmatprep.subr.mxu0 0.0
    %167 = vmatpush1.msra.mxu0 0.0
    %168 = vmatprep.subr.mxu0 0.0
    %169 = vmatpush1.msra.mxu0 0.0
    %170 = vmatprep.subr.mxu0 0.0
    %171 = vmatpush1.msra.mxu0 0.0
    %172 = vmatprep.subr.mxu0 0.0
    %173 = vmatpush1.msra.mxu0 0.0
    %174 = vmatprep.subr.mxu0 0.0
    %175 = vmatpush1.msra.mxu0 0.0
    %176 = vmatprep.subr.mxu0 0.0
    %177 = vmatpush1.msra.mxu0 0.0
    %178 = vmatprep.subr.mxu0 0.0
    %179 = vmatpush1.msra.mxu0 0.0
    %180 = vmatprep.subr.mxu0 0.0
    %181 = vmatpush1.msra.mxu0 0.0
    %182 = vmatprep.subr.mxu0 0.0
    %183 = vmatpush1.msra.mxu0 0.0
    %184 = vmatprep.mubr.f32.mxu0 0.0
    %v185 = vand.u32 %v80, 4294901760
    %v186 = vsub.f32 %v80, %v185
    %v187 = vand.u32 %v186, 4294901760
    %v188 = vsub.f32 %v186, %v187
    %v189 = vand.u32 %v188, 4294901760
    %190 = vmatmul.mubr.f32.gmra.mrb[0].mxu0 %v189
    %v191 = vpop.f32.mrb[0].mxu0
    %v192 = vadd.f32 %v102, %v191
    %v193 = vpop.f32.mrb[0].mxu0
    %194 = vdwg.mxu0
    %195 = vmatprep.subr.mxu0 0.0
    %v196 = vand.u32 %v81, 4294901760
    %v197 = vsub.f32 %v81, %v196
    %v198 = vand.u32 %v197, 4294901760
    %v199 = vsub.f32 %v197, %v198
    %v200 = vand.u32 %v199, 4294901760
    %201 = vmatpush1.msra.mxu0 %v200
    %202 = vmatprep.subr.mxu0 0.0
    %v203 = vand.u32 %v82, 4294901760
    %v204 = vsub.f32 %v82, %v203
    %v205 = vand.u32 %v204, 4294901760
    %v206 = vsub.f32 %v204, %v205
    %v207 = vand.u32 %v206, 4294901760
    %208 = vmatpush1.msra.mxu0 %v207
    %209 = vmatprep.subr.mxu0 0.0
    %v210 = vand.u32 %v83, 4294901760
    %v211 = vsub.f32 %v83, %v210
    %v212 = vand.u32 %v211, 4294901760
    %v213 = vsub.f32 %v211, %v212
    %v214 = vand.u32 %v213, 4294901760
    %215 = vmatpush1.msra.mxu0 %v214
    %216 = vmatprep.subr.mxu0 0.0
    %v217 = vand.u32 %v84, 4294901760
    %v218 = vsub.f32 %v84, %v217
    %v219 = vand.u32 %v218, 4294901760
    %v220 = vsub.f32 %v218, %v219
    %v221 = vand.u32 %v220, 4294901760
    %222 = vmatpush1.msra.mxu0 %v221
    %223 = vmatprep.subr.mxu0 0.0
    %v224 = vand.u32 %v85, 4294901760
    %v225 = vsub.f32 %v85, %v224
    %v226 = vand.u32 %v225, 4294901760
    %v227 = vsub.f32 %v225, %v226
    %v228 = vand.u32 %v227, 4294901760
    %229 = vmatpush1.msra.mxu0 %v228
    %230 = vmatprep.subr.mxu0 0.0
    %v231 = vand.u32 %v86, 4294901760
    %v232 = vsub.f32 %v86, %v231
    %v233 = vand.u32 %v232, 4294901760
    %v234 = vsub.f32 %v232, %v233
    %v235 = vand.u32 %v234, 4294901760
    %236 = vmatpush1.msra.mxu0 %v235
    %237 = vmatprep.subr.mxu0 0.0
    %v238 = vand.u32 %v87, 4294901760
    %v239 = vsub.f32 %v87, %v238
    %v240 = vand.u32 %v239, 4294901760
    %v241 = vsub.f32 %v239, %v240
    %v242 = vand.u32 %v241, 4294901760
    %243 = vmatpush1.msra.mxu0 %v242
    %244 = vmatprep.subr.mxu0 0.0
    %v245 = vand.u32 %v88, 4294901760
    %v246 = vsub.f32 %v88, %v245
    %v247 = vand.u32 %v246, 4294901760
    %v248 = vsub.f32 %v246, %v247
    %v249 = vand.u32 %v248, 4294901760
    %250 = vmatpush1.msra.mxu0 %v249
    %251 = vmatprep.subr.mxu0 0.0
    %v252 = vand.u32 %v89, 4294901760
    %v253 = vsub.f32 %v89, %v252
    %v254 = vand.u32 %v253, 4294901760
    %v255 = vsub.f32 %v253, %v254
    %v256 = vand.u32 %v255, 4294901760
    %257 = vmatpush1.msra.mxu0 %v256
    %258 = vmatprep.subr.mxu0 0.0
    %v259 = vand.u32 %v90, 4294901760
    %v260 = vsub.f32 %v90, %v259
    %v261 = vand.u32 %v260, 4294901760
    %v262 = vsub.f32 %v260, %v261
    %v263 = vand.u32 %v262, 4294901760
    %264 = vmatpush1.msra.mxu0 %v263
    %265 = vmatprep.subr.mxu0 0.0
    %v266 = vand.u32 %v91, 4294901760
    %v267 = vsub.f32 %v91, %v266
    %v268 = vand.u32 %v267, 4294901760
    %v269 = vsub.f32 %v267, %v268
    %v270 = vand.u32 %v269, 4294901760
    %271 = vmatpush1.msra.mxu0 %v270
    %272 = vmatprep.subr.mxu0 0.0
    %v273 = vand.u32 %v92, 4294901760
    %v274 = vsub.f32 %v92, %v273
    %v275 = vand.u32 %v274, 4294901760
    %v276 = vsub.f32 %v274, %v275
    %v277 = vand.u32 %v276, 4294901760
    %278 = vmatpush1.msra.mxu0 %v277
    %279 = vmatprep.subr.mxu0 0.0
    %v280 = vand.u32 %v93, 4294901760
    %v281 = vsub.f32 %v93, %v280
    %v282 = vand.u32 %v281, 4294901760
    %v283 = vsub.f32 %v281, %v282
    %v284 = vand.u32 %v283, 4294901760
    %285 = vmatpush1.msra.mxu0 %v284
    %286 = vmatprep.subr.mxu0 0.0
    %v287 = vand.u32 %v94, 4294901760
    %v288 = vsub.f32 %v94, %v287
    %v289 = vand.u32 %v288, 4294901760
    %v290 = vsub.f32 %v288, %v289
    %v291 = vand.u32 %v290, 4294901760
    %292 = vmatpush1.msra.mxu0 %v291
    %293 = vmatprep.subr.mxu0 0.0
    %v294 = vand.u32 %v95, 4294901760
    %v295 = vsub.f32 %v95, %v294
    %v296 = vand.u32 %v295, 4294901760
    %v297 = vsub.f32 %v295, %v296
    %v298 = vand.u32 %v297, 4294901760
    %299 = vmatpush1.msra.mxu0 %v298
    %300 = vmatprep.subr.mxu0 0.0
    %v301 = vand.u32 %v96, 4294901760
    %v302 = vsub.f32 %v96, %v301
    %v303 = vand.u32 %v302, 4294901760
    %v304 = vsub.f32 %v302, %v303
    %v305 = vand.u32 %v304, 4294901760
    %306 = vmatpush1.msra.mxu0 %v305
    %307 = vmatprep.subr.mxu0 0.0
    %308 = vmatpush1.msra.mxu0 0.0
    %309 = vmatprep.subr.mxu0 0.0
    %310 = vmatpush1.msra.mxu0 0.0
    %311 = vmatprep.subr.mxu0 0.0
    %312 = vmatpush1.msra.mxu0 0.0
    %313 = vmatprep.subr.mxu0 0.0
    %314 = vmatpush1.msra.mxu0 0.0
    %315 = vmatprep.subr.mxu0 0.0
    %316 = vmatpush1.msra.mxu0 0.0
    %317 = vmatprep.subr.mxu0 0.0
    %318 = vmatpush1.msra.mxu0 0.0
    %319 = vmatprep.subr.mxu0 0.0
    %320 = vmatpush1.msra.mxu0 0.0
    %321 = vmatprep.subr.mxu0 0.0
    %322 = vmatpush1.msra.mxu0 0.0
    %323 = vmatprep.subr.mxu0 0.0
    %324 = vmatpush1.msra.mxu0 0.0
    %325 = vmatprep.subr.mxu0 0.0
    %326 = vmatpush1.msra.mxu0 0.0
    %327 = vmatprep.subr.mxu0 0.0
    %328 = vmatpush1.msra.mxu0 0.0
    %329 = vmatprep.subr.mxu0 0.0
    %330 = vmatpush1.msra.mxu0 0.0
    %331 = vmatprep.subr.mxu0 0.0
    %332 = vmatpush1.msra.mxu0 0.0
    %333 = vmatprep.subr.mxu0 0.0
    %334 = vmatpush1.msra.mxu0 0.0
    %335 = vmatprep.subr.mxu0 0.0
    %336 = vmatpush1.msra.mxu0 0.0
    %337 = vmatprep.subr.mxu0 0.0
    %338 = vmatpush1.msra.mxu0 0.0
    %339 = vmatprep.mubr.f32.mxu0 0.0
    %v340 = vand.u32 %v80, 4294901760
    %341 = vmatmul.mubr.f32.gmra.mrb[0].mxu0 %v340
    %v342 = vpop.f32.mrb[0].mxu0
    %v343 = vadd.f32 %v192, %v342
    %v344 = vpop.f32.mrb[0].mxu0
    %345 = vdwg.mxu0
    %346 = vmatprep.subr.mxu0 0.0
    %v347 = vand.u32 %v81, 4294901760
    %v348 = vsub.f32 %v81, %v347
    %349 = vmatpush1.msra.mxu0 %v348
    %350 = vmatprep.subr.mxu0 0.0
    %v351 = vand.u32 %v82, 4294901760
    %v352 = vsub.f32 %v82, %v351
    %353 = vmatpush1.msra.mxu0 %v352
    %354 = vmatprep.subr.mxu0 0.0
    %v355 = vand.u32 %v83, 4294901760
    %v356 = vsub.f32 %v83, %v355
    %357 = vmatpush1.msra.mxu0 %v356
    %358 = vmatprep.subr.mxu0 0.0
    %v359 = vand.u32 %v84, 4294901760
    %v360 = vsub.f32 %v84, %v359
    %361 = vmatpush1.msra.mxu0 %v360
    %362 = vmatprep.subr.mxu0 0.0
    %v363 = vand.u32 %v85, 4294901760
    %v364 = vsub.f32 %v85, %v363
    %365 = vmatpush1.msra.mxu0 %v364
    %366 = vmatprep.subr.mxu0 0.0
    %v367 = vand.u32 %v86, 4294901760
    %v368 = vsub.f32 %v86, %v367
    %369 = vmatpush1.msra.mxu0 %v368
    %370 = vmatprep.subr.mxu0 0.0
    %v371 = vand.u32 %v87, 4294901760
    %v372 = vsub.f32 %v87, %v371
    %373 = vmatpush1.msra.mxu0 %v372
    %374 = vmatprep.subr.mxu0 0.0
    %v375 = vand.u32 %v88, 4294901760
    %v376 = vsub.f32 %v88, %v375
    %377 = vmatpush1.msra.mxu0 %v376
    %378 = vmatprep.subr.mxu0 0.0
    %v379 = vand.u32 %v89, 4294901760
    %v380 = vsub.f32 %v89, %v379
    %381 = vmatpush1.msra.mxu0 %v380
    %382 = vmatprep.subr.mxu0 0.0
    %v383 = vand.u32 %v90, 4294901760
    %v384 = vsub.f32 %v90, %v383
    %385 = vmatpush1.msra.mxu0 %v384
    %386 = vmatprep.subr.mxu0 0.0
    %v387 = vand.u32 %v91, 4294901760
    %v388 = vsub.f32 %v91, %v387
    %389 = vmatpush1.msra.mxu0 %v388
    %390 = vmatprep.subr.mxu0 0.0
    %v391 = vand.u32 %v92, 4294901760
    %v392 = vsub.f32 %v92, %v391
    %393 = vmatpush1.msra.mxu0 %v392
    %394 = vmatprep.subr.mxu0 0.0
    %v395 = vand.u32 %v93, 4294901760
    %v396 = vsub.f32 %v93, %v395
    %397 = vmatpush1.msra.mxu0 %v396
    %398 = vmatprep.subr.mxu0 0.0
    %v399 = vand.u32 %v94, 4294901760
    %v400 = vsub.f32 %v94, %v399
    %401 = vmatpush1.msra.mxu0 %v400
    %402 = vmatprep.subr.mxu0 0.0
    %v403 = vand.u32 %v95, 4294901760
    %v404 = vsub.f32 %v95, %v403
    %405 = vmatpush1.msra.mxu0 %v404
    %406 = vmatprep.subr.mxu0 0.0
    %v407 = vand.u32 %v96, 4294901760
    %v408 = vsub.f32 %v96, %v407
    %409 = vmatpush1.msra.mxu0 %v408
    %410 = vmatprep.subr.mxu0 0.0
    %411 = vmatpush1.msra.mxu0 0.0
    %412 = vmatprep.subr.mxu0 0.0
    %413 = vmatpush1.msra.mxu0 0.0
    %414 = vmatprep.subr.mxu0 0.0
    %415 = vmatpush1.msra.mxu0 0.0
    %416 = vmatprep.subr.mxu0 0.0
    %417 = vmatpush1.msra.mxu0 0.0
    %418 = vmatprep.subr.mxu0 0.0
    %419 = vmatpush1.msra.mxu0 0.0
    %420 = vmatprep.subr.mxu0 0.0
    %421 = vmatpush1.msra.mxu0 0.0
    %422 = vmatprep.subr.mxu0 0.0
    %423 = vmatpush1.msra.mxu0 0.0
    %424 = vmatprep.subr.mxu0 0.0
    %425 = vmatpush1.msra.mxu0 0.0
    %426 = vmatprep.subr.mxu0 0.0
    %427 = vmatpush1.msra.mxu0 0.0
    %428 = vmatprep.subr.mxu0 0.0
    %429 = vmatpush1.msra.mxu0 0.0
    %430 = vmatprep.subr.mxu0 0.0
    %431 = vmatpush1.msra.mxu0 0.0
    %432 = vmatprep.subr.mxu0 0.0
    %433 = vmatpush1.msra.mxu0 0.0
    %434 = vmatprep.subr.mxu0 0.0
    %435 = vmatpush1.msra.mxu0 0.0
    %436 = vmatprep.subr.mxu0 0.0
    %437 = vmatpush1.msra.mxu0 0.0
    %438 = vmatprep.subr.mxu0 0.0
    %439 = vmatpush1.msra.mxu0 0.0
    %440 = vmatprep.subr.mxu0 0.0
    %441 = vmatpush1.msra.mxu0 0.0
    %442 = vmatprep.mubr.f32.mxu0 0.0
    %v443 = vand.u32 %v80, 4294901760
    %v444 = vsub.f32 %v80, %v443
    %445 = vmatmul.mubr.f32.gmra.mrb[0].mxu0 %v444
    %v446 = vpop.f32.mrb[0].mxu0
    %v447 = vadd.f32 %v343, %v446
    %v448 = vpop.f32.mrb[0].mxu0
    %449 = vdwg.mxu0
    %450 = vmatprep.subr.mxu0 0.0
    %v451 = vand.u32 %v81, 4294901760
    %452 = vmatpush1.msra.mxu0 %v451
    %453 = vmatprep.subr.mxu0 0.0
    %v454 = vand.u32 %v82, 4294901760
    %455 = vmatpush1.msra.mxu0 %v454
    %456 = vmatprep.subr.mxu0 0.0
    %v457 = vand.u32 %v83, 4294901760
    %458 = vmatpush1.msra.mxu0 %v457
    %459 = vmatprep.subr.mxu0 0.0
    %v460 = vand.u32 %v84, 4294901760
    %461 = vmatpush1.msra.mxu0 %v460
    %462 = vmatprep.subr.mxu0 0.0
    %v463 = vand.u32 %v85, 4294901760
    %464 = vmatpush1.msra.mxu0 %v463
    %465 = vmatprep.subr.mxu0 0.0
    %v466 = vand.u32 %v86, 4294901760
    %467 = vmatpush1.msra.mxu0 %v466
    %468 = vmatprep.subr.mxu0 0.0
    %v469 = vand.u32 %v87, 4294901760
    %470 = vmatpush1.msra.mxu0 %v469
    %471 = vmatprep.subr.mxu0 0.0
    %v472 = vand.u32 %v88, 4294901760
    %473 = vmatpush1.msra.mxu0 %v472
    %474 = vmatprep.subr.mxu0 0.0
    %v475 = vand.u32 %v89, 4294901760
    %476 = vmatpush1.msra.mxu0 %v475
    %477 = vmatprep.subr.mxu0 0.0
    %v478 = vand.u32 %v90, 4294901760
    %479 = vmatpush1.msra.mxu0 %v478
    %480 = vmatprep.subr.mxu0 0.0
    %v481 = vand.u32 %v91, 4294901760
    %482 = vmatpush1.msra.mxu0 %v481
    %483 = vmatprep.subr.mxu0 0.0
    %v484 = vand.u32 %v92, 4294901760
    %485 = vmatpush1.msra.mxu0 %v484
    %486 = vmatprep.subr.mxu0 0.0
    %v487 = vand.u32 %v93, 4294901760
    %488 = vmatpush1.msra.mxu0 %v487
    %489 = vmatprep.subr.mxu0 0.0
    %v490 = vand.u32 %v94, 4294901760
    %491 = vmatpush1.msra.mxu0 %v490
    %492 = vmatprep.subr.mxu0 0.0
    %v493 = vand.u32 %v95, 4294901760
    %494 = vmatpush1.msra.mxu0 %v493
    %495 = vmatprep.subr.mxu0 0.0
    %v496 = vand.u32 %v96, 4294901760
    %497 = vmatpush1.msra.mxu0 %v496
    %498 = vmatprep.subr.mxu0 0.0
    %499 = vmatpush1.msra.mxu0 0.0
    %500 = vmatprep.subr.mxu0 0.0
    %501 = vmatpush1.msra.mxu0 0.0
    %502 = vmatprep.subr.mxu0 0.0
    %503 = vmatpush1.msra.mxu0 0.0
    %504 = vmatprep.subr.mxu0 0.0
    %505 = vmatpush1.msra.mxu0 0.0
    %506 = vmatprep.subr.mxu0 0.0
    %507 = vmatpush1.msra.mxu0 0.0
    %508 = vmatprep.subr.mxu0 0.0
    %509 = vmatpush1.msra.mxu0 0.0
    %510 = vmatprep.subr.mxu0 0.0
    %511 = vmatpush1.msra.mxu0 0.0
    %512 = vmatprep.subr.mxu0 0.0
    %513 = vmatpush1.msra.mxu0 0.0
    %514 = vmatprep.subr.mxu0 0.0
    %515 = vmatpush1.msra.mxu0 0.0
    %516 = vmatprep.subr.mxu0 0.0
    %517 = vmatpush1.msra.mxu0 0.0
    %518 = vmatprep.subr.mxu0 0.0
    %519 = vmatpush1.msra.mxu0 0.0
    %520 = vmatprep.subr.mxu0 0.0
    %521 = vmatpush1.msra.mxu0 0.0
    %522 = vmatprep.subr.mxu0 0.0
    %523 = vmatpush1.msra.mxu0 0.0
    %524 = vmatprep.subr.mxu0 0.0
    %525 = vmatpush1.msra.mxu0 0.0
    %526 = vmatprep.subr.mxu0 0.0
    %527 = vmatpush1.msra.mxu0 0.0
    %528 = vmatprep.subr.mxu0 0.0
    %529 = vmatpush1.msra.mxu0 0.0
    %530 = vmatprep.mubr.f32.mxu0 0.0
    %v531 = vand.u32 %v80, 4294901760
    %v532 = vsub.f32 %v80, %v531
    %v533 = vand.u32 %v532, 4294901760
    %534 = vmatmul.mubr.f32.gmra.mrb[0].mxu0 %v533
    %v535 = vpop.f32.mrb[0].mxu0
    %v536 = vadd.f32 %v447, %v535
    %v537 = vpop.f32.mrb[0].mxu0
    %538 = vdwg.mxu0
    %539 = vmatprep.subr.mxu0 0.0
    %v540 = vand.u32 %v81, 4294901760
    %v541 = vsub.f32 %v81, %v540
    %v542 = vand.u32 %v541, 4294901760
    %543 = vmatpush1.msra.mxu0 %v542
    %544 = vmatprep.subr.mxu0 0.0
    %v545 = vand.u32 %v82, 4294901760
    %v546 = vsub.f32 %v82, %v545
    %v547 = vand.u32 %v546, 4294901760
    %548 = vmatpush1.msra.mxu0 %v547
    %549 = vmatprep.subr.mxu0 0.0
    %v550 = vand.u32 %v83, 4294901760
    %v551 = vsub.f32 %v83, %v550
    %v552 = vand.u32 %v551, 4294901760
    %553 = vmatpush1.msra.mxu0 %v552
    %554 = vmatprep.subr.mxu0 0.0
    %v555 = vand.u32 %v84, 4294901760
    %v556 = vsub.f32 %v84, %v555
    %v557 = vand.u32 %v556, 4294901760
    %558 = vmatpush1.msra.mxu0 %v557
    %559 = vmatprep.subr.mxu0 0.0
    %v560 = vand.u32 %v85, 4294901760
    %v561 = vsub.f32 %v85, %v560
    %v562 = vand.u32 %v561, 4294901760
    %563 = vmatpush1.msra.mxu0 %v562
    %564 = vmatprep.subr.mxu0 0.0
    %v565 = vand.u32 %v86, 4294901760
    %v566 = vsub.f32 %v86, %v565
    %v567 = vand.u32 %v566, 4294901760
    %568 = vmatpush1.msra.mxu0 %v567
    %569 = vmatprep.subr.mxu0 0.0
    %v570 = vand.u32 %v87, 4294901760
    %v571 = vsub.f32 %v87, %v570
    %v572 = vand.u32 %v571, 4294901760
    %573 = vmatpush1.msra.mxu0 %v572
    %574 = vmatprep.subr.mxu0 0.0
    %v575 = vand.u32 %v88, 4294901760
    %v576 = vsub.f32 %v88, %v575
    %v577 = vand.u32 %v576, 4294901760
    %578 = vmatpush1.msra.mxu0 %v577
    %579 = vmatprep.subr.mxu0 0.0
    %v580 = vand.u32 %v89, 4294901760
    %v581 = vsub.f32 %v89, %v580
    %v582 = vand.u32 %v581, 4294901760
    %583 = vmatpush1.msra.mxu0 %v582
    %584 = vmatprep.subr.mxu0 0.0
    %v585 = vand.u32 %v90, 4294901760
    %v586 = vsub.f32 %v90, %v585
    %v587 = vand.u32 %v586, 4294901760
    %588 = vmatpush1.msra.mxu0 %v587
    %589 = vmatprep.subr.mxu0 0.0
    %v590 = vand.u32 %v91, 4294901760
    %v591 = vsub.f32 %v91, %v590
    %v592 = vand.u32 %v591, 4294901760
    %593 = vmatpush1.msra.mxu0 %v592
    %594 = vmatprep.subr.mxu0 0.0
    %v595 = vand.u32 %v92, 4294901760
    %v596 = vsub.f32 %v92, %v595
    %v597 = vand.u32 %v596, 4294901760
    %598 = vmatpush1.msra.mxu0 %v597
    %599 = vmatprep.subr.mxu0 0.0
    %v600 = vand.u32 %v93, 4294901760
    %v601 = vsub.f32 %v93, %v600
    %v602 = vand.u32 %v601, 4294901760
    %603 = vmatpush1.msra.mxu0 %v602
    %604 = vmatprep.subr.mxu0 0.0
    %v605 = vand.u32 %v94, 4294901760
    %v606 = vsub.f32 %v94, %v605
    %v607 = vand.u32 %v606, 4294901760
    %608 = vmatpush1.msra.mxu0 %v607
    %609 = vmatprep.subr.mxu0 0.0
    %v610 = vand.u32 %v95, 4294901760
    %v611 = vsub.f32 %v95, %v610
    %v612 = vand.u32 %v611, 4294901760
    %613 = vmatpush1.msra.mxu0 %v612
    %614 = vmatprep.subr.mxu0 0.0
    %v615 = vand.u32 %v96, 4294901760
    %v616 = vsub.f32 %v96, %v615
    %v617 = vand.u32 %v616, 4294901760
    %618 = vmatpush1.msra.mxu0 %v617
    %619 = vmatprep.subr.mxu0 0.0
    %620 = vmatpush1.msra.mxu0 0.0
    %621 = vmatprep.subr.mxu0 0.0
    %622 = vmatpush1.msra.mxu0 0.0
    %623 = vmatprep.subr.mxu0 0.0
    %624 = vmatpush1.msra.mxu0 0.0
    %625 = vmatprep.subr.mxu0 0.0
    %626 = vmatpush1.msra.mxu0 0.0
    %627 = vmatprep.subr.mxu0 0.0
    %628 = vmatpush1.msra.mxu0 0.0
    %629 = vmatprep.subr.mxu0 0.0
    %630 = vmatpush1.msra.mxu0 0.0
    %631 = vmatprep.subr.mxu0 0.0
    %632 = vmatpush1.msra.mxu0 0.0
    %633 = vmatprep.subr.mxu0 0.0
    %634 = vmatpush1.msra.mxu0 0.0
    %635 = vmatprep.subr.mxu0 0.0
    %636 = vmatpush1.msra.mxu0 0.0
    %637 = vmatprep.subr.mxu0 0.0
    %638 = vmatpush1.msra.mxu0 0.0
    %639 = vmatprep.subr.mxu0 0.0
    %640 = vmatpush1.msra.mxu0 0.0
    %641 = vmatprep.subr.mxu0 0.0
    %642 = vmatpush1.msra.mxu0 0.0
    %643 = vmatprep.subr.mxu0 0.0
    %644 = vmatpush1.msra.mxu0 0.0
    %645 = vmatprep.subr.mxu0 0.0
    %646 = vmatpush1.msra.mxu0 0.0
    %647 = vmatprep.subr.mxu0 0.0
    %648 = vmatpush1.msra.mxu0 0.0
    %649 = vmatprep.subr.mxu0 0.0
    %650 = vmatpush1.msra.mxu0 0.0
    %651 = vmatprep.mubr.f32.mxu0 0.0
    %v652 = vand.u32 %v80, 4294901760
    %653 = vmatmul.mubr.f32.gmra.mrb[0].mxu0 %v652
    %v654 = vpop.f32.mrb[0].mxu0
    %v655 = vadd.f32 %v536, %v654
    %v656 = vpop.f32.mrb[0].mxu0
    %657 = vdwg.mxu0
    %658 = vmatprep.subr.mxu0 0.0
    %v659 = vand.u32 %v81, 4294901760
    %660 = vmatpush1.msra.mxu0 %v659
    %661 = vmatprep.subr.mxu0 0.0
    %v662 = vand.u32 %v82, 4294901760
    %663 = vmatpush1.msra.mxu0 %v662
    %664 = vmatprep.subr.mxu0 0.0
    %v665 = vand.u32 %v83, 4294901760
    %666 = vmatpush1.msra.mxu0 %v665
    %667 = vmatprep.subr.mxu0 0.0
    %v668 = vand.u32 %v84, 4294901760
    %669 = vmatpush1.msra.mxu0 %v668
    %670 = vmatprep.subr.mxu0 0.0
    %v671 = vand.u32 %v85, 4294901760
    %672 = vmatpush1.msra.mxu0 %v671
    %673 = vmatprep.subr.mxu0 0.0
    %v674 = vand.u32 %v86, 4294901760
    %675 = vmatpush1.msra.mxu0 %v674
    %676 = vmatprep.subr.mxu0 0.0
    %v677 = vand.u32 %v87, 4294901760
    %678 = vmatpush1.msra.mxu0 %v677
    %679 = vmatprep.subr.mxu0 0.0
    %v680 = vand.u32 %v88, 4294901760
    %681 = vmatpush1.msra.mxu0 %v680
    %682 = vmatprep.subr.mxu0 0.0
    %v683 = vand.u32 %v89, 4294901760
    %684 = vmatpush1.msra.mxu0 %v683
    %685 = vmatprep.subr.mxu0 0.0
    %v686 = vand.u32 %v90, 4294901760
    %687 = vmatpush1.msra.mxu0 %v686
    %688 = vmatprep.subr.mxu0 0.0
    %v689 = vand.u32 %v91, 4294901760
    %690 = vmatpush1.msra.mxu0 %v689
    %691 = vmatprep.subr.mxu0 0.0
    %v692 = vand.u32 %v92, 4294901760
    %693 = vmatpush1.msra.mxu0 %v692
    %694 = vmatprep.subr.mxu0 0.0
    %v695 = vand.u32 %v93, 4294901760
    %696 = vmatpush1.msra.mxu0 %v695
    %697 = vmatprep.subr.mxu0 0.0
    %v698 = vand.u32 %v94, 4294901760
    %699 = vmatpush1.msra.mxu0 %v698
    %700 = vmatprep.subr.mxu0 0.0
    %v701 = vand.u32 %v95, 4294901760
    %702 = vmatpush1.msra.mxu0 %v701
    %703 = vmatprep.subr.mxu0 0.0
    %v704 = vand.u32 %v96, 4294901760
    %705 = vmatpush1.msra.mxu0 %v704
    %706 = vmatprep.subr.mxu0 0.0
    %707 = vmatpush1.msra.mxu0 0.0
    %708 = vmatprep.subr.mxu0 0.0
    %709 = vmatpush1.msra.mxu0 0.0
    %710 = vmatprep.subr.mxu0 0.0
    %711 = vmatpush1.msra.mxu0 0.0
    %712 = vmatprep.subr.mxu0 0.0
    %713 = vmatpush1.msra.mxu0 0.0
    %714 = vmatprep.subr.mxu0 0.0
    %715 = vmatpush1.msra.mxu0 0.0
    %716 = vmatprep.subr.mxu0 0.0
    %717 = vmatpush1.msra.mxu0 0.0
    %718 = vmatprep.subr.mxu0 0.0
    %719 = vmatpush1.msra.mxu0 0.0
    %720 = vmatprep.subr.mxu0 0.0
    %721 = vmatpush1.msra.mxu0 0.0
    %722 = vmatprep.subr.mxu0 0.0
    %723 = vmatpush1.msra.mxu0 0.0
    %724 = vmatprep.subr.mxu0 0.0
    %725 = vmatpush1.msra.mxu0 0.0
    %726 = vmatprep.subr.mxu0 0.0
    %727 = vmatpush1.msra.mxu0 0.0
    %728 = vmatprep.subr.mxu0 0.0
    %729 = vmatpush1.msra.mxu0 0.0
    %730 = vmatprep.subr.mxu0 0.0
    %731 = vmatpush1.msra.mxu0 0.0
    %732 = vmatprep.subr.mxu0 0.0
    %733 = vmatpush1.msra.mxu0 0.0
    %734 = vmatprep.subr.mxu0 0.0
    %735 = vmatpush1.msra.mxu0 0.0
    %736 = vmatprep.subr.mxu0 0.0
    %737 = vmatpush1.msra.mxu0 0.0
    %738 = vmatprep.mubr.f32.mxu0 0.0
    %v739 = vand.u32 %v80, 4294901760
    %740 = vmatmul.mubr.f32.gmra.mrb[0].mxu0 %v739
    %v741 = vpop.f32.mrb[0].mxu0
    %v742 = vadd.f32 %v655, %v741
    %v743 = vpop.f32.mrb[0].mxu0
    %744 = vdwg.mxu0
    %v745 = vmax.f32 %v742, 0.0
    %746 = vst [vmem:[#allocation2] sm:$0xff] %v745
    %v747 = vld [vmem:[#allocation2] sm:$0xff]
    %v748 = vld [vmem:[#allocation9] sm:$0xff]
    %v749 = vld [vmem:[#allocation9 + $0x8] sm:$0xff]
    %v750 = vld [vmem:[#allocation9 + $0x10] sm:$0xff]
    %v751 = vld [vmem:[#allocation9 + $0x18] sm:$0xff]
    %v752 = vld [vmem:[#allocation9 + $0x20] sm:$0xff]
    %v753 = vld [vmem:[#allocation9 + $0x28] sm:$0xff]
    %v754 = vld [vmem:[#allocation9 + $0x30] sm:$0xff]
    %v755 = vld [vmem:[#allocation9 + $0x38] sm:$0xff]
    %v756 = vld [vmem:[#allocation9 + $0x40] sm:$0xff]
    %v757 = vld [vmem:[#allocation9 + $0x48] sm:$0xff]
    %v758 = vld [vmem:[#allocation9 + $0x50] sm:$0xff]
    %v759 = vld [vmem:[#allocation9 + $0x58] sm:$0xff]
    %v760 = vld [vmem:[#allocation9 + $0x60] sm:$0xff]
    %v761 = vld [vmem:[#allocation9 + $0x68] sm:$0xff]
    %v762 = vld [vmem:[#allocation9 + $0x70] sm:$0xff]
    %v763 = vld [vmem:[#allocation9 + $0x78] sm:$0xff]
    %v764 = vld [vmem:[%s4] sm:$0x1]
    %v766 = vlaneseq
    %v767 = vshrl.u32 %v766, 7
    %v768 = vsub.s32 0, %v767
    %v769 = vrot.slane %v764, %v768
    %771 = vmatprep.subr.mxu0 0.0
    %v772 = vand.u32 %v748, 4294901760
    %773 = vmatpush1.msra.mxu0 %v772
    %774 = vmatprep.subr.mxu0 0.0
    %v775 = vand.u32 %v749, 4294901760
    %776 = vmatpush1.msra.mxu0 %v775
    %777 = vmatprep.subr.mxu0 0.0
    %v778 = vand.u32 %v750, 4294901760
    %779 = vmatpush1.msra.mxu0 %v778
    %780 = vmatprep.subr.mxu0 0.0
    %v781 = vand.u32 %v751, 4294901760
    %782 = vmatpush1.msra.mxu0 %v781
    %783 = vmatprep.subr.mxu0 0.0
    %v784 = vand.u32 %v752, 4294901760
    %785 = vmatpush1.msra.mxu0 %v784
    %786 = vmatprep.subr.mxu0 0.0
    %v787 = vand.u32 %v753, 4294901760
    %788 = vmatpush1.msra.mxu0 %v787
    %789 = vmatprep.subr.mxu0 0.0
    %v790 = vand.u32 %v754, 4294901760
    %791 = vmatpush1.msra.mxu0 %v790
    %792 = vmatprep.subr.mxu0 0.0
    %v793 = vand.u32 %v755, 4294901760
    %794 = vmatpush1.msra.mxu0 %v793
    %795 = vmatprep.subr.mxu0 0.0
    %v796 = vand.u32 %v756, 4294901760
    %797 = vmatpush1.msra.mxu0 %v796
    %798 = vmatprep.subr.mxu0 0.0
    %v799 = vand.u32 %v757, 4294901760
    %800 = vmatpush1.msra.mxu0 %v799
    %801 = vmatprep.subr.mxu0 0.0
    %v802 = vand.u32 %v758, 4294901760
    %803 = vmatpush1.msra.mxu0 %v802
    %804 = vmatprep.subr.mxu0 0.0
    %v805 = vand.u32 %v759, 4294901760
    %806 = vmatpush1.msra.mxu0 %v805
    %807 = vmatprep.subr.mxu0 0.0
    %v808 = vand.u32 %v760, 4294901760
    %809 = vmatpush1.msra.mxu0 %v808
    %810 = vmatprep.subr.mxu0 0.0
    %v811 = vand.u32 %v761, 4294901760
    %812 = vmatpush1.msra.mxu0 %v811
    %813 = vmatprep.subr.mxu0 0.0
    %v814 = vand.u32 %v762, 4294901760
    %815 = vmatpush1.msra.mxu0 %v814
    %816 = vmatprep.subr.mxu0 0.0
    %v817 = vand.u32 %v763, 4294901760
    %818 = vmatpush1.msra.mxu0 %v817
    %819 = vmatprep.subr.mxu0 0.0
    %820 = vmatpush1.msra.mxu0 0.0
    %821 = vmatprep.subr.mxu0 0.0
    %822 = vmatpush1.msra.mxu0 0.0
    %823 = vmatprep.subr.mxu0 0.0
    %824 = vmatpush1.msra.mxu0 0.0
    %825 = vmatprep.subr.mxu0 0.0
    %826 = vmatpush1.msra.mxu0 0.0
    %827 = vmatprep.subr.mxu0 0.0
    %828 = vmatpush1.msra.mxu0 0.0
    %829 = vmatprep.subr.mxu0 0.0
    %830 = vmatpush1.msra.mxu0 0.0
    %831 = vmatprep.subr.mxu0 0.0
    %832 = vmatpush1.msra.mxu0 0.0
    %833 = vmatprep.subr.mxu0 0.0
    %834 = vmatpush1.msra.mxu0 0.0
    %835 = vmatprep.subr.mxu0 0.0
    %836 = vmatpush1.msra.mxu0 0.0
    %837 = vmatprep.subr.mxu0 0.0
    %838 = vmatpush1.msra.mxu0 0.0
    %839 = vmatprep.subr.mxu0 0.0
    %840 = vmatpush1.msra.mxu0 0.0
    %841 = vmatprep.subr.mxu0 0.0
    %842 = vmatpush1.msra.mxu0 0.0
    %843 = vmatprep.subr.mxu0 0.0
    %844 = vmatpush1.msra.mxu0 0.0
    %845 = vmatprep.subr.mxu0 0.0
    %846 = vmatpush1.msra.mxu0 0.0
    %847 = vmatprep.subr.mxu0 0.0
    %848 = vmatpush1.msra.mxu0 0.0
    %849 = vmatprep.subr.mxu0 0.0
    %850 = vmatpush1.msra.mxu0 0.0
    %851 = vmatprep.mubr.f32.mxu0 0.0
    %v852 = vand.u32 %v747, 4294901760
    %v853 = vsub.f32 %v747, %v852
    %v854 = vand.u32 %v853, 4294901760
    %v855 = vsub.f32 %v853, %v854
    %v856 = vand.u32 %v855, 4294901760
    %857 = vmatmul.mubr.f32.gmra.mrb[0].mxu0 %v856
    %v858 = vpop.f32.mrb[0].mxu0
    %v859 = vadd.f32 %v769, %v858
    %v860 = vpop.f32.mrb[0].mxu0
    %861 = vdwg.mxu0
    %862 = vmatprep.subr.mxu0 0.0
    %v863 = vand.u32 %v748, 4294901760
    %v864 = vsub.f32 %v748, %v863
    %v865 = vand.u32 %v864, 4294901760
    %v866 = vsub.f32 %v864, %v865
    %v867 = vand.u32 %v866, 4294901760
    %868 = vmatpush1.msra.mxu0 %v867
    %869 = vmatprep.subr.mxu0 0.0
    %v870 = vand.u32 %v749, 4294901760
    %v871 = vsub.f32 %v749, %v870
    %v872 = vand.u32 %v871, 4294901760
    %v873 = vsub.f32 %v871, %v872
    %v874 = vand.u32 %v873, 4294901760
    %875 = vmatpush1.msra.mxu0 %v874
    %876 = vmatprep.subr.mxu0 0.0
    %v877 = vand.u32 %v750, 4294901760
    %v878 = vsub.f32 %v750, %v877
    %v879 = vand.u32 %v878, 4294901760
    %v880 = vsub.f32 %v878, %v879
    %v881 = vand.u32 %v880, 4294901760
    %882 = vmatpush1.msra.mxu0 %v881
    %883 = vmatprep.subr.mxu0 0.0
    %v884 = vand.u32 %v751, 4294901760
    %v885 = vsub.f32 %v751, %v884
    %v886 = vand.u32 %v885, 4294901760
    %v887 = vsub.f32 %v885, %v886
    %v888 = vand.u32 %v887, 4294901760
    %889 = vmatpush1.msra.mxu0 %v888
    %890 = vmatprep.subr.mxu0 0.0
    %v891 = vand.u32 %v752, 4294901760
    %v892 = vsub.f32 %v752, %v891
    %v893 = vand.u32 %v892, 4294901760
    %v894 = vsub.f32 %v892, %v893
    %v895 = vand.u32 %v894, 4294901760
    %896 = vmatpush1.msra.mxu0 %v895
    %897 = vmatprep.subr.mxu0 0.0
    %v898 = vand.u32 %v753, 4294901760
    %v899 = vsub.f32 %v753, %v898
    %v900 = vand.u32 %v899, 4294901760
    %v901 = vsub.f32 %v899, %v900
    %v902 = vand.u32 %v901, 4294901760
    %903 = vmatpush1.msra.mxu0 %v902
    %904 = vmatprep.subr.mxu0 0.0
    %v905 = vand.u32 %v754, 4294901760
    %v906 = vsub.f32 %v754, %v905
    %v907 = vand.u32 %v906, 4294901760
    %v908 = vsub.f32 %v906, %v907
    %v909 = vand.u32 %v908, 4294901760
    %910 = vmatpush1.msra.mxu0 %v909
    %911 = vmatprep.subr.mxu0 0.0
    %v912 = vand.u32 %v755, 4294901760
    %v913 = vsub.f32 %v755, %v912
    %v914 = vand.u32 %v913, 4294901760
    %v915 = vsub.f32 %v913, %v914
    %v916 = vand.u32 %v915, 4294901760
    %917 = vmatpush1.msra.mxu0 %v916
    %918 = vmatprep.subr.mxu0 0.0
    %v919 = vand.u32 %v756, 4294901760
    %v920 = vsub.f32 %v756, %v919
    %v921 = vand.u32 %v920, 4294901760
    %v922 = vsub.f32 %v920, %v921
    %v923 = vand.u32 %v922, 4294901760
    %924 = vmatpush1.msra.mxu0 %v923
    %925 = vmatprep.subr.mxu0 0.0
    %v926 = vand.u32 %v757, 4294901760
    %v927 = vsub.f32 %v757, %v926
    %v928 = vand.u32 %v927, 4294901760
    %v929 = vsub.f32 %v927, %v928
    %v930 = vand.u32 %v929, 4294901760
    %931 = vmatpush1.msra.mxu0 %v930
    %932 = vmatprep.subr.mxu0 0.0
    %v933 = vand.u32 %v758, 4294901760
    %v934 = vsub.f32 %v758, %v933
    %v935 = vand.u32 %v934, 4294901760
    %v936 = vsub.f32 %v934, %v935
    %v937 = vand.u32 %v936, 4294901760
    %938 = vmatpush1.msra.mxu0 %v937
    %939 = vmatprep.subr.mxu0 0.0
    %v940 = vand.u32 %v759, 4294901760
    %v941 = vsub.f32 %v759, %v940
    %v942 = vand.u32 %v941, 4294901760
    %v943 = vsub.f32 %v941, %v942
    %v944 = vand.u32 %v943, 4294901760
    %945 = vmatpush1.msra.mxu0 %v944
    %946 = vmatprep.subr.mxu0 0.0
    %v947 = vand.u32 %v760, 4294901760
    %v948 = vsub.f32 %v760, %v947
    %v949 = vand.u32 %v948, 4294901760
    %v950 = vsub.f32 %v948, %v949
    %v951 = vand.u32 %v950, 4294901760
    %952 = vmatpush1.msra.mxu0 %v951
    %953 = vmatprep.subr.mxu0 0.0
    %v954 = vand.u32 %v761, 4294901760
    %v955 = vsub.f32 %v761, %v954
    %v956 = vand.u32 %v955, 4294901760
    %v957 = vsub.f32 %v955, %v956
    %v958 = vand.u32 %v957, 4294901760
    %959 = vmatpush1.msra.mxu0 %v958
    %960 = vmatprep.subr.mxu0 0.0
    %v961 = vand.u32 %v762, 4294901760
    %v962 = vsub.f32 %v762, %v961
    %v963 = vand.u32 %v962, 4294901760
    %v964 = vsub.f32 %v962, %v963
    %v965 = vand.u32 %v964, 4294901760
    %966 = vmatpush1.msra.mxu0 %v965
    %967 = vmatprep.subr.mxu0 0.0
    %v968 = vand.u32 %v763, 4294901760
    %v969 = vsub.f32 %v763, %v968
    %v970 = vand.u32 %v969, 4294901760
    %v971 = vsub.f32 %v969, %v970
    %v972 = vand.u32 %v971, 4294901760
    %973 = vmatpush1.msra.mxu0 %v972
    %974 = vmatprep.subr.mxu0 0.0
    %975 = vmatpush1.msra.mxu0 0.0
    %976 = vmatprep.subr.mxu0 0.0
    %977 = vmatpush1.msra.mxu0 0.0
    %978 = vmatprep.subr.mxu0 0.0
    %979 = vmatpush1.msra.mxu0 0.0
    %980 = vmatprep.subr.mxu0 0.0
    %981 = vmatpush1.msra.mxu0 0.0
    %982 = vmatprep.subr.mxu0 0.0
    %983 = vmatpush1.msra.mxu0 0.0
    %984 = vmatprep.subr.mxu0 0.0
    %985 = vmatpush1.msra.mxu0 0.0
    %986 = vmatprep.subr.mxu0 0.0
    %987 = vmatpush1.msra.mxu0 0.0
    %988 = vmatprep.subr.mxu0 0.0
    %989 = vmatpush1.msra.mxu0 0.0
    %990 = vmatprep.subr.mxu0 0.0
    %991 = vmatpush1.msra.mxu0 0.0
    %992 = vmatprep.subr.mxu0 0.0
    %993 = vmatpush1.msra.mxu0 0.0
    %994 = vmatprep.subr.mxu0 0.0
    %995 = vmatpush1.msra.mxu0 0.0
    %996 = vmatprep.subr.mxu0 0.0
    %997 = vmatpush1.msra.mxu0 0.0
    %998 = vmatprep.subr.mxu0 0.0
    %999 = vmatpush1.msra.mxu0 0.0
    %1000 = vmatprep.subr.mxu0 0.0
    %1001 = vmatpush1.msra.mxu0 0.0
    %1002 = vmatprep.subr.mxu0 0.0
    %1003 = vmatpush1.msra.mxu0 0.0
    %1004 = vmatprep.subr.mxu0 0.0
    %1005 = vmatpush1.msra.mxu0 0.0
    %1006 = vmatprep.mubr.f32.mxu0 0.0
    %v1007 = vand.u32 %v747, 4294901760
    %1008 = vmatmul.mubr.f32.gmra.mrb[0].mxu0 %v1007
    %v1009 = vpop.f32.mrb[0].mxu0
    %v1010 = vadd.f32 %v859, %v1009
    %v1011 = vpop.f32.mrb[0].mxu0
    %1012 = vdwg.mxu0
    %1013 = vmatprep.subr.mxu0 0.0
    %v1014 = vand.u32 %v748, 4294901760
    %v1015 = vsub.f32 %v748, %v1014
    %1016 = vmatpush1.msra.mxu0 %v1015
    %1017 = vmatprep.subr.mxu0 0.0
    %v1018 = vand.u32 %v749, 4294901760
    %v1019 = vsub.f32 %v749, %v1018
    %1020 = vmatpush1.msra.mxu0 %v1019
    %1021 = vmatprep.subr.mxu0 0.0
    %v1022 = vand.u32 %v750, 4294901760
    %v1023 = vsub.f32 %v750, %v1022
    %1024 = vmatpush1.msra.mxu0 %v1023
    %1025 = vmatprep.subr.mxu0 0.0
    %v1026 = vand.u32 %v751, 4294901760
    %v1027 = vsub.f32 %v751, %v1026
    %1028 = vmatpush1.msra.mxu0 %v1027
    %1029 = vmatprep.subr.mxu0 0.0
    %v1030 = vand.u32 %v752, 4294901760
    %v1031 = vsub.f32 %v752, %v1030
    %1032 = vmatpush1.msra.mxu0 %v1031
    %1033 = vmatprep.subr.mxu0 0.0
    %v1034 = vand.u32 %v753, 4294901760
    %v1035 = vsub.f32 %v753, %v1034
    %1036 = vmatpush1.msra.mxu0 %v1035
    %1037 = vmatprep.subr.mxu0 0.0
    %v1038 = vand.u32 %v754, 4294901760
    %v1039 = vsub.f32 %v754, %v1038
    %1040 = vmatpush1.msra.mxu0 %v1039
    %1041 = vmatprep.subr.mxu0 0.0
    %v1042 = vand.u32 %v755, 4294901760
    %v1043 = vsub.f32 %v755, %v1042
    %1044 = vmatpush1.msra.mxu0 %v1043
    %1045 = vmatprep.subr.mxu0 0.0
    %v1046 = vand.u32 %v756, 4294901760
    %v1047 = vsub.f32 %v756, %v1046
    %1048 = vmatpush1.msra.mxu0 %v1047
    %1049 = vmatprep.subr.mxu0 0.0
    %v1050 = vand.u32 %v757, 4294901760
    %v1051 = vsub.f32 %v757, %v1050
    %1052 = vmatpush1.msra.mxu0 %v1051
    %1053 = vmatprep.subr.mxu0 0.0
    %v1054 = vand.u32 %v758, 4294901760
    %v1055 = vsub.f32 %v758, %v1054
    %1056 = vmatpush1.msra.mxu0 %v1055
    %1057 = vmatprep.subr.mxu0 0.0
    %v1058 = vand.u32 %v759, 4294901760
    %v1059 = vsub.f32 %v759, %v1058
    %1060 = vmatpush1.msra.mxu0 %v1059
    %1061 = vmatprep.subr.mxu0 0.0
    %v1062 = vand.u32 %v760, 4294901760
    %v1063 = vsub.f32 %v760, %v1062
    %1064 = vmatpush1.msra.mxu0 %v1063
    %1065 = vmatprep.subr.mxu0 0.0
    %v1066 = vand.u32 %v761, 4294901760
    %v1067 = vsub.f32 %v761, %v1066
    %1068 = vmatpush1.msra.mxu0 %v1067
    %1069 = vmatprep.subr.mxu0 0.0
    %v1070 = vand.u32 %v762, 4294901760
    %v1071 = vsub.f32 %v762, %v1070
    %1072 = vmatpush1.msra.mxu0 %v1071
    %1073 = vmatprep.subr.mxu0 0.0
    %v1074 = vand.u32 %v763, 4294901760
    %v1075 = vsub.f32 %v763, %v1074
    %1076 = vmatpush1.msra.mxu0 %v1075
    %1077 = vmatprep.subr.mxu0 0.0
    %1078 = vmatpush1.msra.mxu0 0.0
    %1079 = vmatprep.subr.mxu0 0.0
    %1080 = vmatpush1.msra.mxu0 0.0
    %1081 = vmatprep.subr.mxu0 0.0
    %1082 = vmatpush1.msra.mxu0 0.0
    %1083 = vmatprep.subr.mxu0 0.0
    %1084 = vmatpush1.msra.mxu0 0.0
    %1085 = vmatprep.subr.mxu0 0.0
    %1086 = vmatpush1.msra.mxu0 0.0
    %1087 = vmatprep.subr.mxu0 0.0
    %1088 = vmatpush1.msra.mxu0 0.0
    %1089 = vmatprep.subr.mxu0 0.0
    %1090 = vmatpush1.msra.mxu0 0.0
    %1091 = vmatprep.subr.mxu0 0.0
    %1092 = vmatpush1.msra.mxu0 0.0
    %1093 = vmatprep.subr.mxu0 0.0
    %1094 = vmatpush1.msra.mxu0 0.0
    %1095 = vmatprep.subr.mxu0 0.0
    %1096 = vmatpush1.msra.mxu0 0.0
    %1097 = vmatprep.subr.mxu0 0.0
    %1098 = vmatpush1.msra.mxu0 0.0
    %1099 = vmatprep.subr.mxu0 0.0
    %1100 = vmatpush1.msra.mxu0 0.0
    %1101 = vmatprep.subr.mxu0 0.0
    %1102 = vmatpush1.msra.mxu0 0.0
    %1103 = vmatprep.subr.mxu0 0.0
    %1104 = vmatpush1.msra.mxu0 0.0
    %1105 = vmatprep.subr.mxu0 0.0
    %1106 = vmatpush1.msra.mxu0 0.0
    %1107 = vmatprep.subr.mxu0 0.0
    %1108 = vmatpush1.msra.mxu0 0.0
    %1109 = vmatprep.mubr.f32.mxu0 0.0
    %v1110 = vand.u32 %v747, 4294901760
    %v1111 = vsub.f32 %v747, %v1110
    %1112 = vmatmul.mubr.f32.gmra.mrb[0].mxu0 %v1111
    %v1113 = vpop.f32.mrb[0].mxu0
    %v1114 = vadd.f32 %v1010, %v1113
    %v1115 = vpop.f32.mrb[0].mxu0
    %1116 = vdwg.mxu0
    %1117 = vmatprep.subr.mxu0 0.0
    %v1118 = vand.u32 %v748, 4294901760
    %1119 = vmatpush1.msra.mxu0 %v1118
    %1120 = vmatprep.subr.mxu0 0.0
    %v1121 = vand.u32 %v749, 4294901760
    %1122 = vmatpush1.msra.mxu0 %v1121
    %1123 = vmatprep.subr.mxu0 0.0
    %v1124 = vand.u32 %v750, 4294901760
    %1125 = vmatpush1.msra.mxu0 %v1124
    %1126 = vmatprep.subr.mxu0 0.0
    %v1127 = vand.u32 %v751, 4294901760
    %1128 = vmatpush1.msra.mxu0 %v1127
    %1129 = vmatprep.subr.mxu0 0.0
    %v1130 = vand.u32 %v752, 4294901760
    %1131 = vmatpush1.msra.mxu0 %v1130
    %1132 = vmatprep.subr.mxu0 0.0
    %v1133 = vand.u32 %v753, 4294901760
    %1134 = vmatpush1.msra.mxu0 %v1133
    %1135 = vmatprep.subr.mxu0 0.0
    %v1136 = vand.u32 %v754, 4294901760
    %1137 = vmatpush1.msra.mxu0 %v1136
    %1138 = vmatprep.subr.mxu0 0.0
    %v1139 = vand.u32 %v755, 4294901760
    %1140 = vmatpush1.msra.mxu0 %v1139
    %1141 = vmatprep.subr.mxu0 0.0
    %v1142 = vand.u32 %v756, 4294901760
    %1143 = vmatpush1.msra.mxu0 %v1142
    %1144 = vmatprep.subr.mxu0 0.0
    %v1145 = vand.u32 %v757, 4294901760
    %1146 = vmatpush1.msra.mxu0 %v1145
    %1147 = vmatprep.subr.mxu0 0.0
    %v1148 = vand.u32 %v758, 4294901760
    %1149 = vmatpush1.msra.mxu0 %v1148
    %1150 = vmatprep.subr.mxu0 0.0
    %v1151 = vand.u32 %v759, 4294901760
    %1152 = vmatpush1.msra.mxu0 %v1151
    %1153 = vmatprep.subr.mxu0 0.0
    %v1154 = vand.u32 %v760, 4294901760
    %1155 = vmatpush1.msra.mxu0 %v1154
    %1156 = vmatprep.subr.mxu0 0.0
    %v1157 = vand.u32 %v761, 4294901760
    %1158 = vmatpush1.msra.mxu0 %v1157
    %1159 = vmatprep.subr.mxu0 0.0
    %v1160 = vand.u32 %v762, 4294901760
    %1161 = vmatpush1.msra.mxu0 %v1160
    %1162 = vmatprep.subr.mxu0 0.0
    %v1163 = vand.u32 %v763, 4294901760
    %1164 = vmatpush1.msra.mxu0 %v1163
    %1165 = vmatprep.subr.mxu0 0.0
    %1166 = vmatpush1.msra.mxu0 0.0
    %1167 = vmatprep.subr.mxu0 0.0
    %1168 = vmatpush1.msra.mxu0 0.0
    %1169 = vmatprep.subr.mxu0 0.0
    %1170 = vmatpush1.msra.mxu0 0.0
    %1171 = vmatprep.subr.mxu0 0.0
    %1172 = vmatpush1.msra.mxu0 0.0
    %1173 = vmatprep.subr.mxu0 0.0
    %1174 = vmatpush1.msra.mxu0 0.0
    %1175 = vmatprep.subr.mxu0 0.0
    %1176 = vmatpush1.msra.mxu0 0.0
    %1177 = vmatprep.subr.mxu0 0.0
    %1178 = vmatpush1.msra.mxu0 0.0
    %1179 = vmatprep.subr.mxu0 0.0
    %1180 = vmatpush1.msra.mxu0 0.0
    %1181 = vmatprep.subr.mxu0 0.0
    %1182 = vmatpush1.msra.mxu0 0.0
    %1183 = vmatprep.subr.mxu0 0.0
    %1184 = vmatpush1.msra.mxu0 0.0
    %1185 = vmatprep.subr.mxu0 0.0
    %1186 = vmatpush1.msra.mxu0 0.0
    %1187 = vmatprep.subr.mxu0 0.0
    %1188 = vmatpush1.msra.mxu0 0.0
    %1189 = vmatprep.subr.mxu0 0.0
    %1190 = vmatpush1.msra.mxu0 0.0
    %1191 = vmatprep.subr.mxu0 0.0
    %1192 = vmatpush1.msra.mxu0 0.0
    %1193 = vmatprep.subr.mxu0 0.0
    %1194 = vmatpush1.msra.mxu0 0.0
    %1195 = vmatprep.subr.mxu0 0.0
    %1196 = vmatpush1.msra.mxu0 0.0
    %1197 = vmatprep.mubr.f32.mxu0 0.0
    %v1198 = vand.u32 %v747, 4294901760
    %v1199 = vsub.f32 %v747, %v1198
    %v1200 = vand.u32 %v1199, 4294901760
    %1201 = vmatmul.mubr.f32.gmra.mrb[0].mxu0 %v1200
    %v1202 = vpop.f32.mrb[0].mxu0
    %v1203 = vadd.f32 %v1114, %v1202
    %v1204 = vpop.f32.mrb[0].mxu0
    %1205 = vdwg.mxu0
    %1206 = vmatprep.subr.mxu0 0.0
    %v1207 = vand.u32 %v748, 4294901760
    %v1208 = vsub.f32 %v748, %v1207
    %v1209 = vand.u32 %v1208, 4294901760
    %1210 = vmatpush1.msra.mxu0 %v1209
    %1211 = vmatprep.subr.mxu0 0.0
    %v1212 = vand.u32 %v749, 4294901760
    %v1213 = vsub.f32 %v749, %v1212
    %v1214 = vand.u32 %v1213, 4294901760
    %1215 = vmatpush1.msra.mxu0 %v1214
    %1216 = vmatprep.subr.mxu0 0.0
    %v1217 = vand.u32 %v750, 4294901760
    %v1218 = vsub.f32 %v750, %v1217
    %v1219 = vand.u32 %v1218, 4294901760
    %1220 = vmatpush1.msra.mxu0 %v1219
    %1221 = vmatprep.subr.mxu0 0.0
    %v1222 = vand.u32 %v751, 4294901760
    %v1223 = vsub.f32 %v751, %v1222
    %v1224 = vand.u32 %v1223, 4294901760
    %1225 = vmatpush1.msra.mxu0 %v1224
    %1226 = vmatprep.subr.mxu0 0.0
    %v1227 = vand.u32 %v752, 4294901760
    %v1228 = vsub.f32 %v752, %v1227
    %v1229 = vand.u32 %v1228, 4294901760
    %1230 = vmatpush1.msra.mxu0 %v1229
    %1231 = vmatprep.subr.mxu0 0.0
    %v1232 = vand.u32 %v753, 4294901760
    %v1233 = vsub.f32 %v753, %v1232
    %v1234 = vand.u32 %v1233, 4294901760
    %1235 = vmatpush1.msra.mxu0 %v1234
    %1236 = vmatprep.subr.mxu0 0.0
    %v1237 = vand.u32 %v754, 4294901760
    %v1238 = vsub.f32 %v754, %v1237
    %v1239 = vand.u32 %v1238, 4294901760
    %1240 = vmatpush1.msra.mxu0 %v1239
    %1241 = vmatprep.subr.mxu0 0.0
    %v1242 = vand.u32 %v755, 4294901760
    %v1243 = vsub.f32 %v755, %v1242
    %v1244 = vand.u32 %v1243, 4294901760
    %1245 = vmatpush1.msra.mxu0 %v1244
    %1246 = vmatprep.subr.mxu0 0.0
    %v1247 = vand.u32 %v756, 4294901760
    %v1248 = vsub.f32 %v756, %v1247
    %v1249 = vand.u32 %v1248, 4294901760
    %1250 = vmatpush1.msra.mxu0 %v1249
    %1251 = vmatprep.subr.mxu0 0.0
    %v1252 = vand.u32 %v757, 4294901760
    %v1253 = vsub.f32 %v757, %v1252
    %v1254 = vand.u32 %v1253, 4294901760
    %1255 = vmatpush1.msra.mxu0 %v1254
    %1256 = vmatprep.subr.mxu0 0.0
    %v1257 = vand.u32 %v758, 4294901760
    %v1258 = vsub.f32 %v758, %v1257
    %v1259 = vand.u32 %v1258, 4294901760
    %1260 = vmatpush1.msra.mxu0 %v1259
    %1261 = vmatprep.subr.mxu0 0.0
    %v1262 = vand.u32 %v759, 4294901760
    %v1263 = vsub.f32 %v759, %v1262
    %v1264 = vand.u32 %v1263, 4294901760
    %1265 = vmatpush1.msra.mxu0 %v1264
    %1266 = vmatprep.subr.mxu0 0.0
    %v1267 = vand.u32 %v760, 4294901760
    %v1268 = vsub.f32 %v760, %v1267
    %v1269 = vand.u32 %v1268, 4294901760
    %1270 = vmatpush1.msra.mxu0 %v1269
    %1271 = vmatprep.subr.mxu0 0.0
    %v1272 = vand.u32 %v761, 4294901760
    %v1273 = vsub.f32 %v761, %v1272
    %v1274 = vand.u32 %v1273, 4294901760
    %1275 = vmatpush1.msra.mxu0 %v1274
    %1276 = vmatprep.subr.mxu0 0.0
    %v1277 = vand.u32 %v762, 4294901760
    %v1278 = vsub.f32 %v762, %v1277
    %v1279 = vand.u32 %v1278, 4294901760
    %1280 = vmatpush1.msra.mxu0 %v1279
    %1281 = vmatprep.subr.mxu0 0.0
    %v1282 = vand.u32 %v763, 4294901760
    %v1283 = vsub.f32 %v763, %v1282
    %v1284 = vand.u32 %v1283, 4294901760
    %1285 = vmatpush1.msra.mxu0 %v1284
    %1286 = vmatprep.subr.mxu0 0.0
    %1287 = vmatpush1.msra.mxu0 0.0
    %1288 = vmatprep.subr.mxu0 0.0
    %1289 = vmatpush1.msra.mxu0 0.0
    %1290 = vmatprep.subr.mxu0 0.0
    %1291 = vmatpush1.msra.mxu0 0.0
    %1292 = vmatprep.subr.mxu0 0.0
    %1293 = vmatpush1.msra.mxu0 0.0
    %1294 = vmatprep.subr.mxu0 0.0
    %1295 = vmatpush1.msra.mxu0 0.0
    %1296 = vmatprep.subr.mxu0 0.0
    %1297 = vmatpush1.msra.mxu0 0.0
    %1298 = vmatprep.subr.mxu0 0.0
    %1299 = vmatpush1.msra.mxu0 0.0
    %1300 = vmatprep.subr.mxu0 0.0
    %1301 = vmatpush1.msra.mxu0 0.0
    %1302 = vmatprep.subr.mxu0 0.0
    %1303 = vmatpush1.msra.mxu0 0.0
    %1304 = vmatprep.subr.mxu0 0.0
    %1305 = vmatpush1.msra.mxu0 0.0
    %1306 = vmatprep.subr.mxu0 0.0
    %1307 = vmatpush1.msra.mxu0 0.0
    %1308 = vmatprep.subr.mxu0 0.0
    %1309 = vmatpush1.msra.mxu0 0.0
    %1310 = vmatprep.subr.mxu0 0.0
    %1311 = vmatpush1.msra.mxu0 0.0
    %1312 = vmatprep.subr.mxu0 0.0
    %1313 = vmatpush1.msra.mxu0 0.0
    %1314 = vmatprep.subr.mxu0 0.0
    %1315 = vmatpush1.msra.mxu0 0.0
    %1316 = vmatprep.subr.mxu0 0.0
    %1317 = vmatpush1.msra.mxu0 0.0
    %1318 = vmatprep.mubr.f32.mxu0 0.0
    %v1319 = vand.u32 %v747, 4294901760
    %1320 = vmatmul.mubr.f32.gmra.mrb[0].mxu0 %v1319
    %v1321 = vpop.f32.mrb[0].mxu0
    %v1322 = vadd.f32 %v1203, %v1321
    %v1323 = vpop.f32.mrb[0].mxu0
    %1324 = vdwg.mxu0
    %1325 = vmatprep.subr.mxu0 0.0
    %v1326 = vand.u32 %v748, 4294901760
    %1327 = vmatpush1.msra.mxu0 %v1326
    %1328 = vmatprep.subr.mxu0 0.0
    %v1329 = vand.u32 %v749, 4294901760
    %1330 = vmatpush1.msra.mxu0 %v1329
    %1331 = vmatprep.subr.mxu0 0.0
    %v1332 = vand.u32 %v750, 4294901760
    %1333 = vmatpush1.msra.mxu0 %v1332
    %1334 = vmatprep.subr.mxu0 0.0
    %v1335 = vand.u32 %v751, 4294901760
    %1336 = vmatpush1.msra.mxu0 %v1335
    %1337 = vmatprep.subr.mxu0 0.0
    %v1338 = vand.u32 %v752, 4294901760
    %1339 = vmatpush1.msra.mxu0 %v1338
    %1340 = vmatprep.subr.mxu0 0.0
    %v1341 = vand.u32 %v753, 4294901760
    %1342 = vmatpush1.msra.mxu0 %v1341
    %1343 = vmatprep.subr.mxu0 0.0
    %v1344 = vand.u32 %v754, 4294901760
    %1345 = vmatpush1.msra.mxu0 %v1344
    %1346 = vmatprep.subr.mxu0 0.0
    %v1347 = vand.u32 %v755, 4294901760
    %1348 = vmatpush1.msra.mxu0 %v1347
    %1349 = vmatprep.subr.mxu0 0.0
    %v1350 = vand.u32 %v756, 4294901760
    %1351 = vmatpush1.msra.mxu0 %v1350
    %1352 = vmatprep.subr.mxu0 0.0
    %v1353 = vand.u32 %v757, 4294901760
    %1354 = vmatpush1.msra.mxu0 %v1353
    %1355 = vmatprep.subr.mxu0 0.0
    %v1356 = vand.u32 %v758, 4294901760
    %1357 = vmatpush1.msra.mxu0 %v1356
    %1358 = vmatprep.subr.mxu0 0.0
    %v1359 = vand.u32 %v759, 4294901760
    %1360 = vmatpush1.msra.mxu0 %v1359
    %1361 = vmatprep.subr.mxu0 0.0
    %v1362 = vand.u32 %v760, 4294901760
    %1363 = vmatpush1.msra.mxu0 %v1362
    %1364 = vmatprep.subr.mxu0 0.0
    %v1365 = vand.u32 %v761, 4294901760
    %1366 = vmatpush1.msra.mxu0 %v1365
    %1367 = vmatprep.subr.mxu0 0.0
    %v1368 = vand.u32 %v762, 4294901760
    %1369 = vmatpush1.msra.mxu0 %v1368
    %1370 = vmatprep.subr.mxu0 0.0
    %v1371 = vand.u32 %v763, 4294901760
    %1372 = vmatpush1.msra.mxu0 %v1371
    %1373 = vmatprep.subr.mxu0 0.0
    %1374 = vmatpush1.msra.mxu0 0.0
    %1375 = vmatprep.subr.mxu0 0.0
    %1376 = vmatpush1.msra.mxu0 0.0
    %1377 = vmatprep.subr.mxu0 0.0
    %1378 = vmatpush1.msra.mxu0 0.0
    %1379 = vmatprep.subr.mxu0 0.0
    %1380 = vmatpush1.msra.mxu0 0.0
    %1381 = vmatprep.subr.mxu0 0.0
    %1382 = vmatpush1.msra.mxu0 0.0
    %1383 = vmatprep.subr.mxu0 0.0
    %1384 = vmatpush1.msra.mxu0 0.0
    %1385 = vmatprep.subr.mxu0 0.0
    %1386 = vmatpush1.msra.mxu0 0.0
    %1387 = vmatprep.subr.mxu0 0.0
    %1388 = vmatpush1.msra.mxu0 0.0
    %1389 = vmatprep.subr.mxu0 0.0
    %1390 = vmatpush1.msra.mxu0 0.0
    %1391 = vmatprep.subr.mxu0 0.0
    %1392 = vmatpush1.msra.mxu0 0.0
    %1393 = vmatprep.subr.mxu0 0.0
    %1394 = vmatpush1.msra.mxu0 0.0
    %1395 = vmatprep.subr.mxu0 0.0
    %1396 = vmatpush1.msra.mxu0 0.0
    %1397 = vmatprep.subr.mxu0 0.0
    %1398 = vmatpush1.msra.mxu0 0.0
    %1399 = vmatprep.subr.mxu0 0.0
    %1400 = vmatpush1.msra.mxu0 0.0
    %1401 = vmatprep.subr.mxu0 0.0
    %1402 = vmatpush1.msra.mxu0 0.0
    %1403 = vmatprep.subr.mxu0 0.0
    %1404 = vmatpush1.msra.mxu0 0.0
    %1405 = vmatprep.mubr.f32.mxu0 0.0
    %v1406 = vand.u32 %v747, 4294901760
    %1407 = vmatmul.mubr.f32.gmra.mrb[0].mxu0 %v1406
    %v1408 = vpop.f32.mrb[0].mxu0
    %v1409 = vadd.f32 %v1322, %v1408
    %v1410 = vpop.f32.mrb[0].mxu0
    %1411 = vdwg.mxu0
    %v1412 = vmax.f32 %v1409, 0.0
    %1413 = vst [vmem:[#allocation3] sm:$0xff] %v1412
    %v1414 = vld [vmem:[#allocation3] sm:$0xff]
    %v1415 = vld [vmem:[#allocation10] sm:$0xff]
    %v1416 = vld [vmem:[#allocation10 + $0x8] sm:$0xff]
    %v1417 = vld [vmem:[#allocation10 + $0x10] sm:$0xff]
    %v1418 = vld [vmem:[#allocation10 + $0x18] sm:$0xff]
    %v1419 = vld [vmem:[#allocation10 + $0x20] sm:$0xff]
    %v1420 = vld [vmem:[#allocation10 + $0x28] sm:$0xff]
    %v1421 = vld [vmem:[#allocation10 + $0x30] sm:$0xff]
    %v1422 = vld [vmem:[#allocation10 + $0x38] sm:$0xff]
    %v1423 = vld [vmem:[#allocation10 + $0x40] sm:$0xff]
    %v1424 = vld [vmem:[#allocation10 + $0x48] sm:$0xff]
    %v1425 = vld [vmem:[#allocation10 + $0x50] sm:$0xff]
    %v1426 = vld [vmem:[#allocation10 + $0x58] sm:$0xff]
    %v1427 = vld [vmem:[#allocation10 + $0x60] sm:$0xff]
    %v1428 = vld [vmem:[#allocation10 + $0x68] sm:$0xff]
    %v1429 = vld [vmem:[#allocation10 + $0x70] sm:$0xff]
    %v1430 = vld [vmem:[#allocation10 + $0x78] sm:$0xff]
    %v1431 = vld [vmem:[%s6] sm:$0x1]
    %v1433 = vlaneseq
    %v1434 = vshrl.u32 %v1433, 7
    %v1435 = vsub.s32 0, %v1434
    %v1436 = vrot.slane %v1431, %v1435
    %1438 = vmatprep.subr.mxu0 0.0
    %v1439 = vand.u32 %v1415, 4294901760
    %1440 = vmatpush1.msra.mxu0 %v1439
    %1441 = vmatprep.subr.mxu0 0.0
    %v1442 = vand.u32 %v1416, 4294901760
    %1443 = vmatpush1.msra.mxu0 %v1442
    %1444 = vmatprep.subr.mxu0 0.0
    %v1445 = vand.u32 %v1417, 4294901760
    %1446 = vmatpush1.msra.mxu0 %v1445
    %1447 = vmatprep.subr.mxu0 0.0
    %v1448 = vand.u32 %v1418, 4294901760
    %1449 = vmatpush1.msra.mxu0 %v1448
    %1450 = vmatprep.subr.mxu0 0.0
    %v1451 = vand.u32 %v1419, 4294901760
    %1452 = vmatpush1.msra.mxu0 %v1451
    %1453 = vmatprep.subr.mxu0 0.0
    %v1454 = vand.u32 %v1420, 4294901760
    %1455 = vmatpush1.msra.mxu0 %v1454
    %1456 = vmatprep.subr.mxu0 0.0
    %v1457 = vand.u32 %v1421, 4294901760
    %1458 = vmatpush1.msra.mxu0 %v1457
    %1459 = vmatprep.subr.mxu0 0.0
    %v1460 = vand.u32 %v1422, 4294901760
    %1461 = vmatpush1.msra.mxu0 %v1460
    %1462 = vmatprep.subr.mxu0 0.0
    %v1463 = vand.u32 %v1423, 4294901760
    %1464 = vmatpush1.msra.mxu0 %v1463
    %1465 = vmatprep.subr.mxu0 0.0
    %v1466 = vand.u32 %v1424, 4294901760
    %1467 = vmatpush1.msra.mxu0 %v1466
    %1468 = vmatprep.subr.mxu0 0.0
    %v1469 = vand.u32 %v1425, 4294901760
    %1470 = vmatpush1.msra.mxu0 %v1469
    %1471 = vmatprep.subr.mxu0 0.0
    %v1472 = vand.u32 %v1426, 4294901760
    %1473 = vmatpush1.msra.mxu0 %v1472
    %1474 = vmatprep.subr.mxu0 0.0
    %v1475 = vand.u32 %v1427, 4294901760
    %1476 = vmatpush1.msra.mxu0 %v1475
    %1477 = vmatprep.subr.mxu0 0.0
    %v1478 = vand.u32 %v1428, 4294901760
    %1479 = vmatpush1.msra.mxu0 %v1478
    %1480 = vmatprep.subr.mxu0 0.0
    %v1481 = vand.u32 %v1429, 4294901760
    %1482 = vmatpush1.msra.mxu0 %v1481
    %1483 = vmatprep.subr.mxu0 0.0
    %v1484 = vand.u32 %v1430, 4294901760
    %1485 = vmatpush1.msra.mxu0 %v1484
    %1486 = vmatprep.subr.mxu0 0.0
    %1487 = vmatpush1.msra.mxu0 0.0
    %1488 = vmatprep.subr.mxu0 0.0
    %1489 = vmatpush1.msra.mxu0 0.0
    %1490 = vmatprep.subr.mxu0 0.0
    %1491 = vmatpush1.msra.mxu0 0.0
    %1492 = vmatprep.subr.mxu0 0.0
    %1493 = vmatpush1.msra.mxu0 0.0
    %1494 = vmatprep.subr.mxu0 0.0
    %1495 = vmatpush1.msra.mxu0 0.0
    %1496 = vmatprep.subr.mxu0 0.0
    %1497 = vmatpush1.msra.mxu0 0.0
    %1498 = vmatprep.subr.mxu0 0.0
    %1499 = vmatpush1.msra.mxu0 0.0
    %1500 = vmatprep.subr.mxu0 0.0
    %1501 = vmatpush1.msra.mxu0 0.0
    %1502 = vmatprep.subr.mxu0 0.0
    %1503 = vmatpush1.msra.mxu0 0.0
    %1504 = vmatprep.subr.mxu0 0.0
    %1505 = vmatpush1.msra.mxu0 0.0
    %1506 = vmatprep.subr.mxu0 0.0
    %1507 = vmatpush1.msra.mxu0 0.0
    %1508 = vmatprep.subr.mxu0 0.0
    %1509 = vmatpush1.msra.mxu0 0.0
    %1510 = vmatprep.subr.mxu0 0.0
    %1511 = vmatpush1.msra.mxu0 0.0
    %1512 = vmatprep.subr.mxu0 0.0
    %1513 = vmatpush1.msra.mxu0 0.0
    %1514 = vmatprep.subr.mxu0 0.0
    %1515 = vmatpush1.msra.mxu0 0.0
    %1516 = vmatprep.subr.mxu0 0.0
    %1517 = vmatpush1.msra.mxu0 0.0
    %1518 = vmatprep.mubr.f32.mxu0 0.0
    %v1519 = vand.u32 %v1414, 4294901760
    %v1520 = vsub.f32 %v1414, %v1519
    %v1521 = vand.u32 %v1520, 4294901760
    %v1522 = vsub.f32 %v1520, %v1521
    %v1523 = vand.u32 %v1522, 4294901760
    %1524 = vmatmul.mubr.f32.gmra.mrb[0].mxu0 %v1523
    %v1525 = vpop.f32.mrb[0].mxu0
    %v1526 = vadd.f32 %v1436, %v1525
    %v1527 = vpop.f32.mrb[0].mxu0
    %1528 = vdwg.mxu0
    %1529 = vmatprep.subr.mxu0 0.0
    %v1530 = vand.u32 %v1415, 4294901760
    %v1531 = vsub.f32 %v1415, %v1530
    %v1532 = vand.u32 %v1531, 4294901760
    %v1533 = vsub.f32 %v1531, %v1532
    %v1534 = vand.u32 %v1533, 4294901760
    %1535 = vmatpush1.msra.mxu0 %v1534
    %1536 = vmatprep.subr.mxu0 0.0
    %v1537 = vand.u32 %v1416, 4294901760
    %v1538 = vsub.f32 %v1416, %v1537
    %v1539 = vand.u32 %v1538, 4294901760
    %v1540 = vsub.f32 %v1538, %v1539
    %v1541 = vand.u32 %v1540, 4294901760
    %1542 = vmatpush1.msra.mxu0 %v1541
    %1543 = vmatprep.subr.mxu0 0.0
    %v1544 = vand.u32 %v1417, 4294901760
    %v1545 = vsub.f32 %v1417, %v1544
    %v1546 = vand.u32 %v1545, 4294901760
    %v1547 = vsub.f32 %v1545, %v1546
    %v1548 = vand.u32 %v1547, 4294901760
    %1549 = vmatpush1.msra.mxu0 %v1548
    %1550 = vmatprep.subr.mxu0 0.0
    %v1551 = vand.u32 %v1418, 4294901760
    %v1552 = vsub.f32 %v1418, %v1551
    %v1553 = vand.u32 %v1552, 4294901760
    %v1554 = vsub.f32 %v1552, %v1553
    %v1555 = vand.u32 %v1554, 4294901760
    %1556 = vmatpush1.msra.mxu0 %v1555
    %1557 = vmatprep.subr.mxu0 0.0
    %v1558 = vand.u32 %v1419, 4294901760
    %v1559 = vsub.f32 %v1419, %v1558
    %v1560 = vand.u32 %v1559, 4294901760
    %v1561 = vsub.f32 %v1559, %v1560
    %v1562 = vand.u32 %v1561, 4294901760
    %1563 = vmatpush1.msra.mxu0 %v1562
    %1564 = vmatprep.subr.mxu0 0.0
    %v1565 = vand.u32 %v1420, 4294901760
    %v1566 = vsub.f32 %v1420, %v1565
    %v1567 = vand.u32 %v1566, 4294901760
    %v1568 = vsub.f32 %v1566, %v1567
    %v1569 = vand.u32 %v1568, 4294901760
    %1570 = vmatpush1.msra.mxu0 %v1569
    %1571 = vmatprep.subr.mxu0 0.0
    %v1572 = vand.u32 %v1421, 4294901760
    %v1573 = vsub.f32 %v1421, %v1572
    %v1574 = vand.u32 %v1573, 4294901760
    %v1575 = vsub.f32 %v1573, %v1574
    %v1576 = vand.u32 %v1575, 4294901760
    %1577 = vmatpush1.msra.mxu0 %v1576
    %1578 = vmatprep.subr.mxu0 0.0
    %v1579 = vand.u32 %v1422, 4294901760
    %v1580 = vsub.f32 %v1422, %v1579
    %v1581 = vand.u32 %v1580, 4294901760
    %v1582 = vsub.f32 %v1580, %v1581
    %v1583 = vand.u32 %v1582, 4294901760
    %1584 = vmatpush1.msra.mxu0 %v1583
    %1585 = vmatprep.subr.mxu0 0.0
    %v1586 = vand.u32 %v1423, 4294901760
    %v1587 = vsub.f32 %v1423, %v1586
    %v1588 = vand.u32 %v1587, 4294901760
    %v1589 = vsub.f32 %v1587, %v1588
    %v1590 = vand.u32 %v1589, 4294901760
    %1591 = vmatpush1.msra.mxu0 %v1590
    %1592 = vmatprep.subr.mxu0 0.0
    %v1593 = vand.u32 %v1424, 4294901760
    %v1594 = vsub.f32 %v1424, %v1593
    %v1595 = vand.u32 %v1594, 4294901760
    %v1596 = vsub.f32 %v1594, %v1595
    %v1597 = vand.u32 %v1596, 4294901760
    %1598 = vmatpush1.msra.mxu0 %v1597
    %1599 = vmatprep.subr.mxu0 0.0
    %v1600 = vand.u32 %v1425, 4294901760
    %v1601 = vsub.f32 %v1425, %v1600
    %v1602 = vand.u32 %v1601, 4294901760
    %v1603 = vsub.f32 %v1601, %v1602
    %v1604 = vand.u32 %v1603, 4294901760
    %1605 = vmatpush1.msra.mxu0 %v1604
    %1606 = vmatprep.subr.mxu0 0.0
    %v1607 = vand.u32 %v1426, 4294901760
    %v1608 = vsub.f32 %v1426, %v1607
    %v1609 = vand.u32 %v1608, 4294901760
    %v1610 = vsub.f32 %v1608, %v1609
    %v1611 = vand.u32 %v1610, 4294901760
    %1612 = vmatpush1.msra.mxu0 %v1611
    %1613 = vmatprep.subr.mxu0 0.0
    %v1614 = vand.u32 %v1427, 4294901760
    %v1615 = vsub.f32 %v1427, %v1614
    %v1616 = vand.u32 %v1615, 4294901760
    %v1617 = vsub.f32 %v1615, %v1616
    %v1618 = vand.u32 %v1617, 4294901760
    %1619 = vmatpush1.msra.mxu0 %v1618
    %1620 = vmatprep.subr.mxu0 0.0
    %v1621 = vand.u32 %v1428, 4294901760
    %v1622 = vsub.f32 %v1428, %v1621
    %v1623 = vand.u32 %v1622, 4294901760
    %v1624 = vsub.f32 %v1622, %v1623
    %v1625 = vand.u32 %v1624, 4294901760
    %1626 = vmatpush1.msra.mxu0 %v1625
    %1627 = vmatprep.subr.mxu0 0.0
    %v1628 = vand.u32 %v1429, 4294901760
    %v1629 = vsub.f32 %v1429, %v1628
    %v1630 = vand.u32 %v1629, 4294901760
    %v1631 = vsub.f32 %v1629, %v1630
    %v1632 = vand.u32 %v1631, 4294901760
    %1633 = vmatpush1.msra.mxu0 %v1632
    %1634 = vmatprep.subr.mxu0 0.0
    %v1635 = vand.u32 %v1430, 4294901760
    %v1636 = vsub.f32 %v1430, %v1635
    %v1637 = vand.u32 %v1636, 4294901760
    %v1638 = vsub.f32 %v1636, %v1637
    %v1639 = vand.u32 %v1638, 4294901760
    %1640 = vmatpush1.msra.mxu0 %v1639
    %1641 = vmatprep.subr.mxu0 0.0
    %1642 = vmatpush1.msra.mxu0 0.0
    %1643 = vmatprep.subr.mxu0 0.0
    %1644 = vmatpush1.msra.mxu0 0.0
    %1645 = vmatprep.subr.mxu0 0.0
    %1646 = vmatpush1.msra.mxu0 0.0
    %1647 = vmatprep.subr.mxu0 0.0
    %1648 = vmatpush1.msra.mxu0 0.0
    %1649 = vmatprep.subr.mxu0 0.0
    %1650 = vmatpush1.msra.mxu0 0.0
    %1651 = vmatprep.subr.mxu0 0.0
    %1652 = vmatpush1.msra.mxu0 0.0
    %1653 = vmatprep.subr.mxu0 0.0
    %1654 = vmatpush1.msra.mxu0 0.0
    %1655 = vmatprep.subr.mxu0 0.0
    %1656 = vmatpush1.msra.mxu0 0.0
    %1657 = vmatprep.subr.mxu0 0.0
    %1658 = vmatpush1.msra.mxu0 0.0
    %1659 = vmatprep.subr.mxu0 0.0
    %1660 = vmatpush1.msra.mxu0 0.0
    %1661 = vmatprep.subr.mxu0 0.0
    %1662 = vmatpush1.msra.mxu0 0.0
    %1663 = vmatprep.subr.mxu0 0.0
    %1664 = vmatpush1.msra.mxu0 0.0
    %1665 = vmatprep.subr.mxu0 0.0
    %1666 = vmatpush1.msra.mxu0 0.0
    %1667 = vmatprep.subr.mxu0 0.0
    %1668 = vmatpush1.msra.mxu0 0.0
    %1669 = vmatprep.subr.mxu0 0.0
    %1670 = vmatpush1.msra.mxu0 0.0
    %1671 = vmatprep.subr.mxu0 0.0
    %1672 = vmatpush1.msra.mxu0 0.0
    %1673 = vmatprep.mubr.f32.mxu0 0.0
    %v1674 = vand.u32 %v1414, 4294901760
    %1675 = vmatmul.mubr.f32.gmra.mrb[0].mxu0 %v1674
    %v1676 = vpop.f32.mrb[0].mxu0
    %v1677 = vadd.f32 %v1526, %v1676
    %v1678 = vpop.f32.mrb[0].mxu0
    %1679 = vdwg.mxu0
    %1680 = vmatprep.subr.mxu0 0.0
    %v1681 = vand.u32 %v1415, 4294901760
    %v1682 = vsub.f32 %v1415, %v1681
    %1683 = vmatpush1.msra.mxu0 %v1682
    %1684 = vmatprep.subr.mxu0 0.0
    %v1685 = vand.u32 %v1416, 4294901760
    %v1686 = vsub.f32 %v1416, %v1685
    %1687 = vmatpush1.msra.mxu0 %v1686
    %1688 = vmatprep.subr.mxu0 0.0
    %v1689 = vand.u32 %v1417, 4294901760
    %v1690 = vsub.f32 %v1417, %v1689
    %1691 = vmatpush1.msra.mxu0 %v1690
    %1692 = vmatprep.subr.mxu0 0.0
    %v1693 = vand.u32 %v1418, 4294901760
    %v1694 = vsub.f32 %v1418, %v1693
    %1695 = vmatpush1.msra.mxu0 %v1694
    %1696 = vmatprep.subr.mxu0 0.0
    %v1697 = vand.u32 %v1419, 4294901760
    %v1698 = vsub.f32 %v1419, %v1697
    %1699 = vmatpush1.msra.mxu0 %v1698
    %1700 = vmatprep.subr.mxu0 0.0
    %v1701 = vand.u32 %v1420, 4294901760
    %v1702 = vsub.f32 %v1420, %v1701
    %1703 = vmatpush1.msra.mxu0 %v1702
    %1704 = vmatprep.subr.mxu0 0.0
    %v1705 = vand.u32 %v1421, 4294901760
    %v1706 = vsub.f32 %v1421, %v1705
    %1707 = vmatpush1.msra.mxu0 %v1706
    %1708 = vmatprep.subr.mxu0 0.0
    %v1709 = vand.u32 %v1422, 4294901760
    %v1710 = vsub.f32 %v1422, %v1709
    %1711 = vmatpush1.msra.mxu0 %v1710
    %1712 = vmatprep.subr.mxu0 0.0
    %v1713 = vand.u32 %v1423, 4294901760
    %v1714 = vsub.f32 %v1423, %v1713
    %1715 = vmatpush1.msra.mxu0 %v1714
    %1716 = vmatprep.subr.mxu0 0.0
    %v1717 = vand.u32 %v1424, 4294901760
    %v1718 = vsub.f32 %v1424, %v1717
    %1719 = vmatpush1.msra.mxu0 %v1718
    %1720 = vmatprep.subr.mxu0 0.0
    %v1721 = vand.u32 %v1425, 4294901760
    %v1722 = vsub.f32 %v1425, %v1721
    %1723 = vmatpush1.msra.mxu0 %v1722
    %1724 = vmatprep.subr.mxu0 0.0
    %v1725 = vand.u32 %v1426, 4294901760
    %v1726 = vsub.f32 %v1426, %v1725
    %1727 = vmatpush1.msra.mxu0 %v1726
    %1728 = vmatprep.subr.mxu0 0.0
    %v1729 = vand.u32 %v1427, 4294901760
    %v1730 = vsub.f32 %v1427, %v1729
    %1731 = vmatpush1.msra.mxu0 %v1730
    %1732 = vmatprep.subr.mxu0 0.0
    %v1733 = vand.u32 %v1428, 4294901760
    %v1734 = vsub.f32 %v1428, %v1733
    %1735 = vmatpush1.msra.mxu0 %v1734
    %1736 = vmatprep.subr.mxu0 0.0
    %v1737 = vand.u32 %v1429, 4294901760
    %v1738 = vsub.f32 %v1429, %v1737
    %1739 = vmatpush1.msra.mxu0 %v1738
    %1740 = vmatprep.subr.mxu0 0.0
    %v1741 = vand.u32 %v1430, 4294901760
    %v1742 = vsub.f32 %v1430, %v1741
    %1743 = vmatpush1.msra.mxu0 %v1742
    %1744 = vmatprep.subr.mxu0 0.0
    %1745 = vmatpush1.msra.mxu0 0.0
    %1746 = vmatprep.subr.mxu0 0.0
    %1747 = vmatpush1.msra.mxu0 0.0
    %1748 = vmatprep.subr.mxu0 0.0
    %1749 = vmatpush1.msra.mxu0 0.0
    %1750 = vmatprep.subr.mxu0 0.0
    %1751 = vmatpush1.msra.mxu0 0.0
    %1752 = vmatprep.subr.mxu0 0.0
    %1753 = vmatpush1.msra.mxu0 0.0
    %1754 = vmatprep.subr.mxu0 0.0
    %1755 = vmatpush1.msra.mxu0 0.0
    %1756 = vmatprep.subr.mxu0 0.0
    %1757 = vmatpush1.msra.mxu0 0.0
    %1758 = vmatprep.subr.mxu0 0.0
    %1759 = vmatpush1.msra.mxu0 0.0
    %1760 = vmatprep.subr.mxu0 0.0
    %1761 = vmatpush1.msra.mxu0 0.0
    %1762 = vmatprep.subr.mxu0 0.0
    %1763 = vmatpush1.msra.mxu0 0.0
    %1764 = vmatprep.subr.mxu0 0.0
    %1765 = vmatpush1.msra.mxu0 0.0
    %1766 = vmatprep.subr.mxu0 0.0
    %1767 = vmatpush1.msra.mxu0 0.0
    %1768 = vmatprep.subr.mxu0 0.0
    %1769 = vmatpush1.msra.mxu0 0.0
    %1770 = vmatprep.subr.mxu0 0.0
    %1771 = vmatpush1.msra.mxu0 0.0
    %1772 = vmatprep.subr.mxu0 0.0
    %1773 = vmatpush1.msra.mxu0 0.0
    %1774 = vmatprep.subr.mxu0 0.0
    %1775 = vmatpush1.msra.mxu0 0.0
    %1776 = vmatprep.mubr.f32.mxu0 0.0
    %v1777 = vand.u32 %v1414, 4294901760
    %v1778 = vsub.f32 %v1414, %v1777
    %1779 = vmatmul.mubr.f32.gmra.mrb[0].mxu0 %v1778
    %v1780 = vpop.f32.mrb[0].mxu0
    %v1781 = vadd.f32 %v1677, %v1780
    %v1782 = vpop.f32.mrb[0].mxu0
    %1783 = vdwg.mxu0
    %1784 = vmatprep.subr.mxu0 0.0
    %v1785 = vand.u32 %v1415, 4294901760
    %1786 = vmatpush1.msra.mxu0 %v1785
    %1787 = vmatprep.subr.mxu0 0.0
    %v1788 = vand.u32 %v1416, 4294901760
    %1789 = vmatpush1.msra.mxu0 %v1788
    %1790 = vmatprep.subr.mxu0 0.0
    %v1791 = vand.u32 %v1417, 4294901760
    %1792 = vmatpush1.msra.mxu0 %v1791
    %1793 = vmatprep.subr.mxu0 0.0
    %v1794 = vand.u32 %v1418, 4294901760
    %1795 = vmatpush1.msra.mxu0 %v1794
    %1796 = vmatprep.subr.mxu0 0.0
    %v1797 = vand.u32 %v1419, 4294901760
    %1798 = vmatpush1.msra.mxu0 %v1797
    %1799 = vmatprep.subr.mxu0 0.0
    %v1800 = vand.u32 %v1420, 4294901760
    %1801 = vmatpush1.msra.mxu0 %v1800
    %1802 = vmatprep.subr.mxu0 0.0
    %v1803 = vand.u32 %v1421, 4294901760
    %1804 = vmatpush1.msra.mxu0 %v1803
    %1805 = vmatprep.subr.mxu0 0.0
    %v1806 = vand.u32 %v1422, 4294901760
    %1807 = vmatpush1.msra.mxu0 %v1806
    %1808 = vmatprep.subr.mxu0 0.0
    %v1809 = vand.u32 %v1423, 4294901760
    %1810 = vmatpush1.msra.mxu0 %v1809
    %1811 = vmatprep.subr.mxu0 0.0
    %v1812 = vand.u32 %v1424, 4294901760
    %1813 = vmatpush1.msra.mxu0 %v1812
    %1814 = vmatprep.subr.mxu0 0.0
    %v1815 = vand.u32 %v1425, 4294901760
    %1816 = vmatpush1.msra.mxu0 %v1815
    %1817 = vmatprep.subr.mxu0 0.0
    %v1818 = vand.u32 %v1426, 4294901760
    %1819 = vmatpush1.msra.mxu0 %v1818
    %1820 = vmatprep.subr.mxu0 0.0
    %v1821 = vand.u32 %v1427, 4294901760
    %1822 = vmatpush1.msra.mxu0 %v1821
    %1823 = vmatprep.subr.mxu0 0.0
    %v1824 = vand.u32 %v1428, 4294901760
    %1825 = vmatpush1.msra.mxu0 %v1824
    %1826 = vmatprep.subr.mxu0 0.0
    %v1827 = vand.u32 %v1429, 4294901760
    %1828 = vmatpush1.msra.mxu0 %v1827
    %1829 = vmatprep.subr.mxu0 0.0
    %v1830 = vand.u32 %v1430, 4294901760
    %1831 = vmatpush1.msra.mxu0 %v1830
    %1832 = vmatprep.subr.mxu0 0.0
    %1833 = vmatpush1.msra.mxu0 0.0
    %1834 = vmatprep.subr.mxu0 0.0
    %1835 = vmatpush1.msra.mxu0 0.0
    %1836 = vmatprep.subr.mxu0 0.0
    %1837 = vmatpush1.msra.mxu0 0.0
    %1838 = vmatprep.subr.mxu0 0.0
    %1839 = vmatpush1.msra.mxu0 0.0
    %1840 = vmatprep.subr.mxu0 0.0
    %1841 = vmatpush1.msra.mxu0 0.0
    %1842 = vmatprep.subr.mxu0 0.0
    %1843 = vmatpush1.msra.mxu0 0.0
    %1844 = vmatprep.subr.mxu0 0.0
    %1845 = vmatpush1.msra.mxu0 0.0
    %1846 = vmatprep.subr.mxu0 0.0
    %1847 = vmatpush1.msra.mxu0 0.0
    %1848 = vmatprep.subr.mxu0 0.0
    %1849 = vmatpush1.msra.mxu0 0.0
    %1850 = vmatprep.subr.mxu0 0.0
    %1851 = vmatpush1.msra.mxu0 0.0
    %1852 = vmatprep.subr.mxu0 0.0
    %1853 = vmatpush1.msra.mxu0 0.0
    %1854 = vmatprep.subr.mxu0 0.0
    %1855 = vmatpush1.msra.mxu0 0.0
    %1856 = vmatprep.subr.mxu0 0.0
    %1857 = vmatpush1.msra.mxu0 0.0
    %1858 = vmatprep.subr.mxu0 0.0
    %1859 = vmatpush1.msra.mxu0 0.0
    %1860 = vmatprep.subr.mxu0 0.0
    %1861 = vmatpush1.msra.mxu0 0.0
    %1862 = vmatprep.subr.mxu0 0.0
    %1863 = vmatpush1.msra.mxu0 0.0
    %1864 = vmatprep.mubr.f32.mxu0 0.0
    %v1865 = vand.u32 %v1414, 4294901760
    %v1866 = vsub.f32 %v1414, %v1865
    %v1867 = vand.u32 %v1866, 4294901760
    %1868 = vmatmul.mubr.f32.gmra.mrb[0].mxu0 %v1867
    %v1869 = vpop.f32.mrb[0].mxu0
    %v1870 = vadd.f32 %v1781, %v1869
    %v1871 = vpop.f32.mrb[0].mxu0
    %1872 = vdwg.mxu0
    %1873 = vmatprep.subr.mxu0 0.0
    %v1874 = vand.u32 %v1415, 4294901760
    %v1875 = vsub.f32 %v1415, %v1874
    %v1876 = vand.u32 %v1875, 4294901760
    %1877 = vmatpush1.msra.mxu0 %v1876
    %1878 = vmatprep.subr.mxu0 0.0
    %v1879 = vand.u32 %v1416, 4294901760
    %v1880 = vsub.f32 %v1416, %v1879
    %v1881 = vand.u32 %v1880, 4294901760
    %1882 = vmatpush1.msra.mxu0 %v1881
    %1883 = vmatprep.subr.mxu0 0.0
    %v1884 = vand.u32 %v1417, 4294901760
    %v1885 = vsub.f32 %v1417, %v1884
    %v1886 = vand.u32 %v1885, 4294901760
    %1887 = vmatpush1.msra.mxu0 %v1886
    %1888 = vmatprep.subr.mxu0 0.0
    %v1889 = vand.u32 %v1418, 4294901760
    %v1890 = vsub.f32 %v1418, %v1889
    %v1891 = vand.u32 %v1890, 4294901760
    %1892 = vmatpush1.msra.mxu0 %v1891
    %1893 = vmatprep.subr.mxu0 0.0
    %v1894 = vand.u32 %v1419, 4294901760
    %v1895 = vsub.f32 %v1419, %v1894
    %v1896 = vand.u32 %v1895, 4294901760
    %1897 = vmatpush1.msra.mxu0 %v1896
    %1898 = vmatprep.subr.mxu0 0.0
    %v1899 = vand.u32 %v1420, 4294901760
    %v1900 = vsub.f32 %v1420, %v1899
    %v1901 = vand.u32 %v1900, 4294901760
    %1902 = vmatpush1.msra.mxu0 %v1901
    %1903 = vmatprep.subr.mxu0 0.0
    %v1904 = vand.u32 %v1421, 4294901760
    %v1905 = vsub.f32 %v1421, %v1904
    %v1906 = vand.u32 %v1905, 4294901760
    %1907 = vmatpush1.msra.mxu0 %v1906
    %1908 = vmatprep.subr.mxu0 0.0
    %v1909 = vand.u32 %v1422, 4294901760
    %v1910 = vsub.f32 %v1422, %v1909
    %v1911 = vand.u32 %v1910, 4294901760
    %1912 = vmatpush1.msra.mxu0 %v1911
    %1913 = vmatprep.subr.mxu0 0.0
    %v1914 = vand.u32 %v1423, 4294901760
    %v1915 = vsub.f32 %v1423, %v1914
    %v1916 = vand.u32 %v1915, 4294901760
    %1917 = vmatpush1.msra.mxu0 %v1916
    %1918 = vmatprep.subr.mxu0 0.0
    %v1919 = vand.u32 %v1424, 4294901760
    %v1920 = vsub.f32 %v1424, %v1919
    %v1921 = vand.u32 %v1920, 4294901760
    %1922 = vmatpush1.msra.mxu0 %v1921
    %1923 = vmatprep.subr.mxu0 0.0
    %v1924 = vand.u32 %v1425, 4294901760
    %v1925 = vsub.f32 %v1425, %v1924
    %v1926 = vand.u32 %v1925, 4294901760
    %1927 = vmatpush1.msra.mxu0 %v1926
    %1928 = vmatprep.subr.mxu0 0.0
    %v1929 = vand.u32 %v1426, 4294901760
    %v1930 = vsub.f32 %v1426, %v1929
    %v1931 = vand.u32 %v1930, 4294901760
    %1932 = vmatpush1.msra.mxu0 %v1931
    %1933 = vmatprep.subr.mxu0 0.0
    %v1934 = vand.u32 %v1427, 4294901760
    %v1935 = vsub.f32 %v1427, %v1934
    %v1936 = vand.u32 %v1935, 4294901760
    %1937 = vmatpush1.msra.mxu0 %v1936
    %1938 = vmatprep.subr.mxu0 0.0
    %v1939 = vand.u32 %v1428, 4294901760
    %v1940 = vsub.f32 %v1428, %v1939
    %v1941 = vand.u32 %v1940, 4294901760
    %1942 = vmatpush1.msra.mxu0 %v1941
    %1943 = vmatprep.subr.mxu0 0.0
    %v1944 = vand.u32 %v1429, 4294901760
    %v1945 = vsub.f32 %v1429, %v1944
    %v1946 = vand.u32 %v1945, 4294901760
    %1947 = vmatpush1.msra.mxu0 %v1946
    %1948 = vmatprep.subr.mxu0 0.0
    %v1949 = vand.u32 %v1430, 4294901760
    %v1950 = vsub.f32 %v1430, %v1949
    %v1951 = vand.u32 %v1950, 4294901760
    %1952 = vmatpush1.msra.mxu0 %v1951
    %1953 = vmatprep.subr.mxu0 0.0
    %1954 = vmatpush1.msra.mxu0 0.0
    %1955 = vmatprep.subr.mxu0 0.0
    %1956 = vmatpush1.msra.mxu0 0.0
    %1957 = vmatprep.subr.mxu0 0.0
    %1958 = vmatpush1.msra.mxu0 0.0
    %1959 = vmatprep.subr.mxu0 0.0
    %1960 = vmatpush1.msra.mxu0 0.0
    %1961 = vmatprep.subr.mxu0 0.0
    %1962 = vmatpush1.msra.mxu0 0.0
    %1963 = vmatprep.subr.mxu0 0.0
    %1964 = vmatpush1.msra.mxu0 0.0
    %1965 = vmatprep.subr.mxu0 0.0
    %1966 = vmatpush1.msra.mxu0 0.0
    %1967 = vmatprep.subr.mxu0 0.0
    %1968 = vmatpush1.msra.mxu0 0.0
    %1969 = vmatprep.subr.mxu0 0.0
    %1970 = vmatpush1.msra.mxu0 0.0
    %1971 = vmatprep.subr.mxu0 0.0
    %1972 = vmatpush1.msra.mxu0 0.0
    %1973 = vmatprep.subr.mxu0 0.0
    %1974 = vmatpush1.msra.mxu0 0.0
    %1975 = vmatprep.subr.mxu0 0.0
    %1976 = vmatpush1.msra.mxu0 0.0
    %1977 = vmatprep.subr.mxu0 0.0
    %1978 = vmatpush1.msra.mxu0 0.0
    %1979 = vmatprep.subr.mxu0 0.0
    %1980 = vmatpush1.msra.mxu0 0.0
    %1981 = vmatprep.subr.mxu0 0.0
    %1982 = vmatpush1.msra.mxu0 0.0
    %1983 = vmatprep.subr.mxu0 0.0
    %1984 = vmatpush1.msra.mxu0 0.0
    %1985 = vmatprep.mubr.f32.mxu0 0.0
    %v1986 = vand.u32 %v1414, 4294901760
    %1987 = vmatmul.mubr.f32.gmra.mrb[0].mxu0 %v1986
    %v1988 = vpop.f32.mrb[0].mxu0
    %v1989 = vadd.f32 %v1870, %v1988
    %v1990 = vpop.f32.mrb[0].mxu0
    %1991 = vdwg.mxu0
    %1992 = vmatprep.subr.mxu0 0.0
    %v1993 = vand.u32 %v1415, 4294901760
    %1994 = vmatpush1.msra.mxu0 %v1993
    %1995 = vmatprep.subr.mxu0 0.0
    %v1996 = vand.u32 %v1416, 4294901760
    %1997 = vmatpush1.msra.mxu0 %v1996
    %1998 = vmatprep.subr.mxu0 0.0
    %v1999 = vand.u32 %v1417, 4294901760
    %2000 = vmatpush1.msra.mxu0 %v1999
    %2001 = vmatprep.subr.mxu0 0.0
    %v2002 = vand.u32 %v1418, 4294901760
    %2003 = vmatpush1.msra.mxu0 %v2002
    %2004 = vmatprep.subr.mxu0 0.0
    %v2005 = vand.u32 %v1419, 4294901760
    %2006 = vmatpush1.msra.mxu0 %v2005
    %2007 = vmatprep.subr.mxu0 0.0
    %v2008 = vand.u32 %v1420, 4294901760
    %2009 = vmatpush1.msra.mxu0 %v2008
    %2010 = vmatprep.subr.mxu0 0.0
    %v2011 = vand.u32 %v1421, 4294901760
    %2012 = vmatpush1.msra.mxu0 %v2011
    %2013 = vmatprep.subr.mxu0 0.0
    %v2014 = vand.u32 %v1422, 4294901760
    %2015 = vmatpush1.msra.mxu0 %v2014
    %2016 = vmatprep.subr.mxu0 0.0
    %v2017 = vand.u32 %v1423, 4294901760
    %2018 = vmatpush1.msra.mxu0 %v2017
    %2019 = vmatprep.subr.mxu0 0.0
    %v2020 = vand.u32 %v1424, 4294901760
    %2021 = vmatpush1.msra.mxu0 %v2020
    %2022 = vmatprep.subr.mxu0 0.0
    %v2023 = vand.u32 %v1425, 4294901760
    %2024 = vmatpush1.msra.mxu0 %v2023
    %2025 = vmatprep.subr.mxu0 0.0
    %v2026 = vand.u32 %v1426, 4294901760
    %2027 = vmatpush1.msra.mxu0 %v2026
    %2028 = vmatprep.subr.mxu0 0.0
    %v2029 = vand.u32 %v1427, 4294901760
    %2030 = vmatpush1.msra.mxu0 %v2029
    %2031 = vmatprep.subr.mxu0 0.0
    %v2032 = vand.u32 %v1428, 4294901760
    %2033 = vmatpush1.msra.mxu0 %v2032
    %2034 = vmatprep.subr.mxu0 0.0
    %v2035 = vand.u32 %v1429, 4294901760
    %2036 = vmatpush1.msra.mxu0 %v2035
    %2037 = vmatprep.subr.mxu0 0.0
    %v2038 = vand.u32 %v1430, 4294901760
    %2039 = vmatpush1.msra.mxu0 %v2038
    %2040 = vmatprep.subr.mxu0 0.0
    %2041 = vmatpush1.msra.mxu0 0.0
    %2042 = vmatprep.subr.mxu0 0.0
    %2043 = vmatpush1.msra.mxu0 0.0
    %2044 = vmatprep.subr.mxu0 0.0
    %2045 = vmatpush1.msra.mxu0 0.0
    %2046 = vmatprep.subr.mxu0 0.0
    %2047 = vmatpush1.msra.mxu0 0.0
    %2048 = vmatprep.subr.mxu0 0.0
    %2049 = vmatpush1.msra.mxu0 0.0
    %2050 = vmatprep.subr.mxu0 0.0
    %2051 = vmatpush1.msra.mxu0 0.0
    %2052 = vmatprep.subr.mxu0 0.0
    %2053 = vmatpush1.msra.mxu0 0.0
    %2054 = vmatprep.subr.mxu0 0.0
    %2055 = vmatpush1.msra.mxu0 0.0
    %2056 = vmatprep.subr.mxu0 0.0
    %2057 = vmatpush1.msra.mxu0 0.0
    %2058 = vmatprep.subr.mxu0 0.0
    %2059 = vmatpush1.msra.mxu0 0.0
    %2060 = vmatprep.subr.mxu0 0.0
    %2061 = vmatpush1.msra.mxu0 0.0
    %2062 = vmatprep.subr.mxu0 0.0
    %2063 = vmatpush1.msra.mxu0 0.0
    %2064 = vmatprep.subr.mxu0 0.0
    %2065 = vmatpush1.msra.mxu0 0.0
    %2066 = vmatprep.subr.mxu0 0.0
    %2067 = vmatpush1.msra.mxu0 0.0
    %2068 = vmatprep.subr.mxu0 0.0
    %2069 = vmatpush1.msra.mxu0 0.0
    %2070 = vmatprep.subr.mxu0 0.0
    %2071 = vmatpush1.msra.mxu0 0.0
    %2072 = vmatprep.mubr.f32.mxu0 0.0
    %v2073 = vand.u32 %v1414, 4294901760
    %2074 = vmatmul.mubr.f32.gmra.mrb[0].mxu0 %v2073
    %v2075 = vpop.f32.mrb[0].mxu0
    %v2076 = vadd.f32 %v1989, %v2075
    %v2077 = vpop.f32.mrb[0].mxu0
    %2078 = vdwg.mxu0
    %2079 = vst [vmem:[#allocation12] sm:$0xff] %v2076
    // Predicated region
    $region46: #{tpu_custom_call.1} parent=1 // pred_check
      _
    $region47: #{tpu_custom_call.1} parent=1 // pred_check_branch
      %2081 = sbr.rel (0) target = $region49
    $region48: #{tpu_custom_call.1} parent=1 // pred_region
      %s2083 = ssub.s32 128, 128
      %2084 = vsyncadd [#allocation6], %s2083
      %s2086 = sshll.u32 [#allocation12], 4
      %s2087 = int_to_ptr.vmem [resolvable:$true] %s2086
      %2089 = dma.vmem_to_hbm [thread:$0]  %s2087, 128, %s7, [#allocation6]
    $region49: #{tpu_custom_call.1} parent=1 // pred_fallthru
      _
    // Predicated region
    $region50: #{tpu_custom_call.1} parent=1 // pred_check
      _
    $region51: #{tpu_custom_call.1} parent=1 // pred_check_branch
      %2091 = sbr.rel (0) target = $region53
    $region52: #{tpu_custom_call.1} parent=1 // pred_region
      %2092 = dma.done [#allocation6], 128
    $region53: #{tpu_custom_call.1} parent=1 // pred_fallthru
      _
    %2093 = vsyncpa [#allocation5], 1
    %2094 = vsyncpa [#allocation8], 1
    %2095 = vsyncpa [#allocation11], 1
    %2096 = vsyncpa [#allocation6], 1

</llo_original>
